<compile_context>
chip_gen: v7x
topology: tpu7x:2x2x1
jax: 0.10.0
libtpu: 0.0.40
codegen_flags: <defaults>
</compile_context>

<pallas_src>
import functools

import jax
import jax.numpy as jnp
from jax.experimental import pallas as pl
from jax.experimental.pallas import tpu as pltpu


# Placement of the image inside the zero-padded VMEM scratch: tile-aligned
# offsets so the interior store needs no relayout; the +/-1 shifted window
# reads are plain static slices around this origin (reads only at unaligned
# offsets, which is the proven path).
_R0 = 8      # sublane-aligned row offset   (>= 1 zero row above / below)
_C0 = 128    # lane-aligned column offset   (>= 1 zero column left / right)


def _gradient_loss_kernel(pred_ref, vi_ref, ir_ref, out_ref, pad_ref, *,
                          operator, if_th, threshold, gamma):
    TB, H, W = pred_ref.shape
    PH, PW = pad_ref.shape

    # ---- border-only zeroing (once per grid step; interior is overwritten
    #      by every image before it is read).  All starts are tile-aligned;
    #      any overlap with the interior is re-written by the image stores.
    r_bot = _R0 + (H // 8) * 8          # sublane-aligned, <= _R0 + H
    c_right = _C0 + (W // 128) * 128    # lane-aligned,    <= _C0 + W
    pad_ref[0:_R0, :] = jnp.zeros((_R0, PW), jnp.float32)
    pad_ref[r_bot:, :] = jnp.zeros((PH - r_bot, PW), jnp.float32)
    pad_ref[:, 0:_C0] = jnp.zeros((PH, _C0), jnp.float32)
    pad_ref[:, c_right:] = jnp.zeros((PH, PW - c_right), jnp.float32)

    # Threshold on the *squared* magnitude: g > th  <=>  g*g > th*|th|
    # (g >= 0; for th < 0 the condition is always true, matching th*|th| < 0).
    th_sq = float(threshold) * abs(float(threshold))

    def windows(ref, b):
        """Store image b into the zero-padded scratch; win(r, c)[i, j] equals
        img[i + r - 1, j + c - 1] with zeros outside (3x3 conv taps, pad=1)."""
        x = ref[b].astype(jnp.float32)          # upcast in-register (bf16 ok)
        pad_ref[_R0:_R0 + H, _C0:_C0 + W] = x

        def win(r, c):
            return pad_ref[_R0 - 1 + r:_R0 - 1 + r + H,
                           _C0 - 1 + c:_C0 - 1 + c + W]

        return x, win

    def edge_sq(ref, b):
        """Thresholded squared gradient magnitude gx^2 + gy^2 + 1e-10 for
        sobel / prewitt; sqrt and gamma are applied later, fused."""
        _, w = windows(ref, b)
        w00 = w(0, 0); w01 = w(0, 1); w02 = w(0, 2)
        w10 = w(1, 0);                w12 = w(1, 2)
        w20 = w(2, 0); w21 = w(2, 1); w22 = w(2, 2)
        # Shared corner differences: saves 2 VALU ops / elem / image.
        p = w02 - w20
        q = w00 - w22
        d1 = w12 - w10
        d2 = w01 - w21
        if operator == "sobel":
            gx = (p - q) + 2.0 * d1
            gy = (p + q) + 2.0 * d2
        else:  # prewitt
            gx = (p - q) + d1
            gy = (p + q) + d2
        sq = gx * gx + gy * gy + 1e-10
        if if_th:
            sq = jnp.where(sq > th_sq, 0.0, sq)
        return sq

    def lap_abs(ref, b):
        """Thresholded |laplacian|."""
        x, w = windows(ref, b)
        g = (w(0, 1) + w(1, 0) + w(1, 2) + w(2, 1)) - 4.0 * x
        g = jnp.abs(g)
        if if_th:
            g = jnp.where(g > threshold, 0.0, g)
        return g

    if operator in ("sobel", "prewitt"):
        # Gamma correction of sqrt(sq): (sqrt(sq_th) + 1e-10) ** gamma, with
        # the sqrt fused into the power.  The inner 1e-20 reproduces
        # (1e-10)**gamma exactly at thresholded zeros; elsewhere the deviation
        # is O(1e-9) (within the tolerance checked below).
        def gamma_corr(sq):
            if gamma == 1.0:
                return jnp.sqrt(sq) + 1e-10            # no exp/log at all
            return jnp.exp((0.5 * gamma) * jnp.log(sq + 1e-20))

        grad = edge_sq
    else:  # laplacian
        def gamma_corr(t):
            if gamma == 1.0:
                return t + 1e-10
            return jnp.exp(gamma * jnp.log(t + 1e-10))

        grad = lap_abs

    part = jnp.float32(0.0)
    for b in range(TB):          # static unroll over the per-step batch tile
        g_vi = grad(vi_ref, b)
        g_ir = grad(ir_ref, b)
        if gamma > 0.0:          # monotone -> hoist gamma above the max (exact)
            g_max = gamma_corr(jnp.maximum(g_vi, g_ir))
        else:
            g_max = jnp.maximum(gamma_corr(g_vi), gamma_corr(g_ir))
        g_pred = gamma_corr(grad(pred_ref, b))
        part = part + jnp.sum(jnp.abs(g_pred - g_max))

    # Lane-dense per-step partial output (read back as [:, 0, 0] in JAX).
    out_ref[...] = jnp.full(out_ref.shape, part, dtype=jnp.float32)


@functools.lru_cache(maxsize=1)
def _vmem_limit_bytes():
    """Per-generation scoped-VMEM limit (defaults are only 16/32 MiB)."""
    try:
        cap = int(pltpu.get_tpu_info().vmem_capacity_bytes)
    except Exception:
        cap = 0
    if cap <= 0:
        return 48 * 1024 * 1024            # safe fallback on every generation
    # ~100 MiB on v5e/v6e (128 MiB physical); ~0.85*64 MiB on v7x.
    return min(100 * 1024 * 1024, int(cap * 0.85))


def _pick_batch_tile(N, H, W):
    """Small images: process several batch images per grid step to amortize
    the ~0.35 us per-step overhead (largest divisor of N up to 8)."""
    if W >= 128 and H * W > 128 * 128:
        return 1
    tb = 1
    for d in range(1, min(N, 8) + 1):
        if N % d == 0:
            tb = d
    return tb


def gradient_loss(pred, vi, ir, *, if_th="yes", threshold=0.1, gamma=1.0,
                  operator="sobel"):
    """Pallas implementation of GradientLoss.forward.  Returns a scalar f32."""
    N, C, H, W = pred.shape
    assert C == 1, "conv2d weight [1,1,3,3] with groups=1 requires in_channels==1"

    # No cast / padding in HBM: inputs go to the kernel as-is (f32 or bf16);
    # the conv halo is built in VMEM inside the kernel.
    def prep(x):
        return x.reshape(N, H, W)

    TB = _pick_batch_tile(N, H, W)
    G = N // TB

    kernel = functools.partial(
        _gradient_loss_kernel,
        operator=operator,
        if_th=(if_th == "yes"),
        threshold=float(threshold),
        gamma=float(gamma),
    )

    img_spec = pl.BlockSpec((TB, H, W), lambda i: (i, 0, 0))
    partials = pl.pallas_call(
        kernel,
        out_shape=jax.ShapeDtypeStruct((G, 8, 128), jnp.float32),
        grid=(G,),
        in_specs=[img_spec, img_spec, img_spec],
        out_specs=pl.BlockSpec((1, 8, 128), lambda i: (i, 0, 0)),
        scratch_shapes=[pltpu.VMEM((H + 2 * _R0, W + 2 * _C0), jnp.float32)],
        compiler_params=pltpu.CompilerParams(
            dimension_semantics=("parallel",),
            vmem_limit_bytes=_vmem_limit_bytes()),
    )(prep(pred), prep(vi), prep(ir))

    return jnp.sum(partials[:, 0, 0]) / jnp.float32(N * C * H * W)


# -------------------- pure-JAX reference for sanity check --------------------
_KERNELS = {
    "laplacian": ((0.0, 1.0, 0.0), (1.0, -4.0, 1.0), (0.0, 1.0, 0.0)),
    "sobel_x": ((-1.0, 0.0, 1.0), (-2.0, 0.0, 2.0), (-1.0, 0.0, 1.0)),
    "sobel_y": ((1.0, 2.0, 1.0), (0.0, 0.0, 0.0), (-1.0, -2.0, -1.0)),
    "prewitt_x": ((-1.0, 0.0, 1.0), (-1.0, 0.0, 1.0), (-1.0, 0.0, 1.0)),
    "prewitt_y": ((1.0, 1.0, 1.0), (0.0, 0.0, 0.0), (-1.0, -1.0, -1.0)),
}


def _reference(pred, vi, ir, *, if_th, threshold, gamma, operator):
    def conv(x, w):
        w = jnp.asarray(w, jnp.float32)[None, None]  # OIHW
        return jax.lax.conv_general_dilated(
            x.astype(jnp.float32), w, (1, 1), ((1, 1), (1, 1)),
            dimension_numbers=("NCHW", "OIHW", "NCHW"))

    def gm(x):
        if operator in ("sobel", "prewitt"):
            gx = conv(x, _KERNELS[operator + "_x"])
            gy = conv(x, _KERNELS[operator + "_y"])
            g = jnp.sqrt(gx * gx + gy * gy + 1e-10)
        else:
            g = conv(x, _KERNELS["laplacian"])
        g = jnp.abs(g)
        if if_th == "yes":
            g = jnp.where(g > threshold, 0.0, g)
        return jnp.power(g + 1e-10, gamma)

    gp, gv, gi = gm(pred), gm(vi), gm(ir)
    return jnp.mean(jnp.abs(gp - jnp.maximum(gv, gi)))


if __name__ == "__main__":
    key = jax.random.PRNGKey(0)
    k1, k2, k3 = jax.random.split(key, 3)
    N, C, H, W = 2, 1, 16, 16
    pred = jax.random.uniform(k1, (N, C, H, W), jnp.float32)
    vi = jax.random.uniform(k2, (N, C, H, W), jnp.float32)
    ir = jax.random.uniform(k3, (N, C, H, W), jnp.float32)

    configs = [
        dict(if_th="yes", threshold=2.0, gamma=0.8, operator="sobel"),
        dict(if_th="no", threshold=0.1, gamma=1.0, operator="sobel"),
        dict(if_th="yes", threshold=1.5, gamma=1.2, operator="laplacian"),
        dict(if_th="yes", threshold=2.0, gamma=1.0, operator="prewitt"),
    ]
    for cfg in configs:
        loss = gradient_loss(pred, vi, ir, **cfg)
        jax.block_until_ready(loss)
        ref = _reference(pred, vi, ir, **cfg)
        assert jnp.allclose(loss, ref, rtol=1e-4, atol=1e-5), (cfg, loss, ref)

    # bf16 input path (v5e DMA-bound case): same bf16-rounded inputs to both
    # kernel and reference; all internal math stays f32.
    cfg = dict(if_th="yes", threshold=2.0, gamma=0.8, operator="sobel")
    pred_b, vi_b, ir_b = (x.astype(jnp.bfloat16) for x in (pred, vi, ir))
    loss = gradient_loss(pred_b, vi_b, ir_b, **cfg)
    jax.block_until_ready(loss)
    ref = _reference(pred_b, vi_b, ir_b, **cfg)
    assert jnp.allclose(loss, ref, rtol=1e-4, atol=1e-5), ("bf16", loss, ref)

    print("KERNEL_OK")
</pallas_src>

<mosaic_0001>
module attributes {stable_mosaic.version = 11 : i64} {
  func.func @_gradient_loss_kernel(%arg0: i32, %arg1: memref<2x16x16xf32, #tpu.memory_space<vmem>>, %arg2: memref<2x16x16xf32, #tpu.memory_space<vmem>>, %arg3: memref<2x16x16xf32, #tpu.memory_space<vmem>>, %arg4: memref<1x8x128xf32, #tpu.memory_space<vmem>>, %arg5: memref<32x272xf32, #tpu.memory_space<vmem>>) attributes {dimension_semantics = [#tpu.dimension_semantics<parallel>], iteration_bounds = array<i64: 1>, scalar_prefetch = 0 : i64, scratch_operands = 1 : i64, tpu.core_type = #tpu.core_type<tc>, window_params = [{transform_indices = @transform_0, window_bounds = array<i64: 2, 16, 16>}, {transform_indices = @transform_1, window_bounds = array<i64: 2, 16, 16>}, {transform_indices = @transform_2, window_bounds = array<i64: 2, 16, 16>}, {transform_indices = @transform_3, window_bounds = array<i64: 1, 8, 128>}]} {
    %cst = arith.constant 0.000000e+00 : f32
    %0 = vector.broadcast %cst : f32 to vector<8x272xf32>
    %c0 = arith.constant 0 : index
    %c0_0 = arith.constant 0 : index
    %1 = vector.load %arg5[%c0, %c0_0] : memref<32x272xf32, #tpu.memory_space<vmem>>, vector<8x272xf32>
    tpu.vector_store %arg5[%c0, %c0_0], %0 {strides = array<i32>} : memref<32x272xf32, #tpu.memory_space<vmem>>, vector<8x272xf32>,
    %cst_1 = arith.constant 0.000000e+00 : f32
    %2 = vector.broadcast %cst_1 : f32 to vector<8x272xf32>
    %c24 = arith.constant 24 : index
    %c0_2 = arith.constant 0 : index
    %3 = vector.load %arg5[%c24, %c0_2] : memref<32x272xf32, #tpu.memory_space<vmem>>, vector<8x272xf32>
    tpu.vector_store %arg5[%c24, %c0_2], %2 {strides = array<i32>} : memref<32x272xf32, #tpu.memory_space<vmem>>, vector<8x272xf32>,
    %cst_3 = arith.constant 0.000000e+00 : f32
    %4 = vector.broadcast %cst_3 : f32 to vector<32x128xf32>
    %c0_4 = arith.constant 0 : index
    %c0_5 = arith.constant 0 : index
    %5 = vector.load %arg5[%c0_4, %c0_5] : memref<32x272xf32, #tpu.memory_space<vmem>>, vector<32x128xf32>
    tpu.vector_store %arg5[%c0_4, %c0_5], %4 {strides = array<i32>} : memref<32x272xf32, #tpu.memory_space<vmem>>, vector<32x128xf32>,
    %cst_6 = arith.constant 0.000000e+00 : f32
    %6 = vector.broadcast %cst_6 : f32 to vector<32x144xf32>
    %c0_7 = arith.constant 0 : index
    %c128 = arith.constant 128 : index
    %7 = vector.load %arg5[%c0_7, %c128] : memref<32x272xf32, #tpu.memory_space<vmem>>, vector<32x144xf32>
    tpu.vector_store %arg5[%c0_7, %c128], %6 {strides = array<i32>} : memref<32x272xf32, #tpu.memory_space<vmem>>, vector<32x144xf32>,
    %c0_8 = arith.constant 0 : index
    %c0_9 = arith.constant 0 : index
    %c0_10 = arith.constant 0 : index
    %8 = vector.load %arg2[%c0_8, %c0_9, %c0_10] : memref<2x16x16xf32, #tpu.memory_space<vmem>>, vector<1x16x16xf32>
    %9 = vector.shape_cast %8 : vector<1x16x16xf32> to vector<16x16xf32>
    %c8 = arith.constant 8 : index
    %c128_11 = arith.constant 128 : index
    %10 = vector.load %arg5[%c8, %c128_11] : memref<32x272xf32, #tpu.memory_space<vmem>>, vector<16x16xf32>
    tpu.vector_store %arg5[%c8, %c128_11], %9 {strides = array<i32>} : memref<32x272xf32, #tpu.memory_space<vmem>>, vector<16x16xf32>,
    %c7 = arith.constant 7 : index
    %c127 = arith.constant 127 : index
    %11 = vector.load %arg5[%c7, %c127] : memref<32x272xf32, #tpu.memory_space<vmem>>, vector<16x16xf32>
    %c7_12 = arith.constant 7 : index
    %c128_13 = arith.constant 128 : index
    %12 = vector.load %arg5[%c7_12, %c128_13] : memref<32x272xf32, #tpu.memory_space<vmem>>, vector<16x16xf32>
    %c7_14 = arith.constant 7 : index
    %c129 = arith.constant 129 : index
    %13 = vector.load %arg5[%c7_14, %c129] : memref<32x272xf32, #tpu.memory_space<vmem>>, vector<16x16xf32>
    %c8_15 = arith.constant 8 : index
    %c127_16 = arith.constant 127 : index
    %14 = vector.load %arg5[%c8_15, %c127_16] : memref<32x272xf32, #tpu.memory_space<vmem>>, vector<16x16xf32>
    %c8_17 = arith.constant 8 : index
    %c129_18 = arith.constant 129 : index
    %15 = vector.load %arg5[%c8_17, %c129_18] : memref<32x272xf32, #tpu.memory_space<vmem>>, vector<16x16xf32>
    %c9 = arith.constant 9 : index
    %c127_19 = arith.constant 127 : index
    %16 = vector.load %arg5[%c9, %c127_19] : memref<32x272xf32, #tpu.memory_space<vmem>>, vector<16x16xf32>
    %c9_20 = arith.constant 9 : index
    %c128_21 = arith.constant 128 : index
    %17 = vector.load %arg5[%c9_20, %c128_21] : memref<32x272xf32, #tpu.memory_space<vmem>>, vector<16x16xf32>
    %c9_22 = arith.constant 9 : index
    %c129_23 = arith.constant 129 : index
    %18 = vector.load %arg5[%c9_22, %c129_23] : memref<32x272xf32, #tpu.memory_space<vmem>>, vector<16x16xf32>
    %19 = arith.subf %13, %16 : vector<16x16xf32>
    %20 = arith.subf %11, %18 : vector<16x16xf32>
    %21 = arith.subf %15, %14 : vector<16x16xf32>
    %22 = arith.subf %12, %17 : vector<16x16xf32>
    %23 = arith.subf %19, %20 : vector<16x16xf32>
    %cst_24 = arith.constant 2.000000e+00 : f32
    %24 = vector.broadcast %cst_24 : f32 to vector<16x16xf32>
    %25 = arith.mulf %24, %21 : vector<16x16xf32>
    %26 = arith.addf %23, %25 : vector<16x16xf32>
    %27 = arith.addf %19, %20 : vector<16x16xf32>
    %cst_25 = arith.constant 2.000000e+00 : f32
    %28 = vector.broadcast %cst_25 : f32 to vector<16x16xf32>
    %29 = arith.mulf %28, %22 : vector<16x16xf32>
    %30 = arith.addf %27, %29 : vector<16x16xf32>
    %31 = arith.mulf %26, %26 : vector<16x16xf32>
    %32 = arith.mulf %30, %30 : vector<16x16xf32>
    %33 = arith.addf %31, %32 : vector<16x16xf32>
    %cst_26 = arith.constant 1.000000e-10 : f32
    %34 = vector.broadcast %cst_26 : f32 to vector<16x16xf32>
    %35 = arith.addf %33, %34 : vector<16x16xf32>
    %cst_27 = arith.constant 4.000000e+00 : f32
    %36 = vector.broadcast %cst_27 : f32 to vector<16x16xf32>
    %37 = arith.cmpf ogt, %35, %36 : vector<16x16xf32>
    %cst_28 = arith.constant 0.000000e+00 : f32
    %38 = vector.broadcast %cst_28 : f32 to vector<16x16xf32>
    %39 = arith.select %37, %38, %35 : vector<16x16xi1>, vector<16x16xf32>
    %c0_29 = arith.constant 0 : index
    %c0_30 = arith.constant 0 : index
    %c0_31 = arith.constant 0 : index
    %40 = vector.load %arg3[%c0_29, %c0_30, %c0_31] : memref<2x16x16xf32, #tpu.memory_space<vmem>>, vector<1x16x16xf32>
    %41 = vector.shape_cast %40 : vector<1x16x16xf32> to vector<16x16xf32>
    %c8_32 = arith.constant 8 : index
    %c128_33 = arith.constant 128 : index
    %42 = vector.load %arg5[%c8_32, %c128_33] : memref<32x272xf32, #tpu.memory_space<vmem>>, vector<16x16xf32>
    tpu.vector_store %arg5[%c8_32, %c128_33], %41 {strides = array<i32>} : memref<32x272xf32, #tpu.memory_space<vmem>>, vector<16x16xf32>,
    %c7_34 = arith.constant 7 : index
    %c127_35 = arith.constant 127 : index
    %43 = vector.load %arg5[%c7_34, %c127_35] : memref<32x272xf32, #tpu.memory_space<vmem>>, vector<16x16xf32>
    %c7_36 = arith.constant 7 : index
    %c128_37 = arith.constant 128 : index
    %44 = vector.load %arg5[%c7_36, %c128_37] : memref<32x272xf32, #tpu.memory_space<vmem>>, vector<16x16xf32>
    %c7_38 = arith.constant 7 : index
    %c129_39 = arith.constant 129 : index
    %45 = vector.load %arg5[%c7_38, %c129_39] : memref<32x272xf32, #tpu.memory_space<vmem>>, vector<16x16xf32>
    %c8_40 = arith.constant 8 : index
    %c127_41 = arith.constant 127 : index
    %46 = vector.load %arg5[%c8_40, %c127_41] : memref<32x272xf32, #tpu.memory_space<vmem>>, vector<16x16xf32>
    %c8_42 = arith.constant 8 : index
    %c129_43 = arith.constant 129 : index
    %47 = vector.load %arg5[%c8_42, %c129_43] : memref<32x272xf32, #tpu.memory_space<vmem>>, vector<16x16xf32>
    %c9_44 = arith.constant 9 : index
    %c127_45 = arith.constant 127 : index
    %48 = vector.load %arg5[%c9_44, %c127_45] : memref<32x272xf32, #tpu.memory_space<vmem>>, vector<16x16xf32>
    %c9_46 = arith.constant 9 : index
    %c128_47 = arith.constant 128 : index
    %49 = vector.load %arg5[%c9_46, %c128_47] : memref<32x272xf32, #tpu.memory_space<vmem>>, vector<16x16xf32>
    %c9_48 = arith.constant 9 : index
    %c129_49 = arith.constant 129 : index
    %50 = vector.load %arg5[%c9_48, %c129_49] : memref<32x272xf32, #tpu.memory_space<vmem>>, vector<16x16xf32>
    %51 = arith.subf %45, %48 : vector<16x16xf32>
    %52 = arith.subf %43, %50 : vector<16x16xf32>
    %53 = arith.subf %47, %46 : vector<16x16xf32>
    %54 = arith.subf %44, %49 : vector<16x16xf32>
    %55 = arith.subf %51, %52 : vector<16x16xf32>
    %cst_50 = arith.constant 2.000000e+00 : f32
    %56 = vector.broadcast %cst_50 : f32 to vector<16x16xf32>
    %57 = arith.mulf %56, %53 : vector<16x16xf32>
    %58 = arith.addf %55, %57 : vector<16x16xf32>
    %59 = arith.addf %51, %52 : vector<16x16xf32>
    %cst_51 = arith.constant 2.000000e+00 : f32
    %60 = vector.broadcast %cst_51 : f32 to vector<16x16xf32>
    %61 = arith.mulf %60, %54 : vector<16x16xf32>
    %62 = arith.addf %59, %61 : vector<16x16xf32>
    %63 = arith.mulf %58, %58 : vector<16x16xf32>
    %64 = arith.mulf %62, %62 : vector<16x16xf32>
    %65 = arith.addf %63, %64 : vector<16x16xf32>
    %cst_52 = arith.constant 1.000000e-10 : f32
    %66 = vector.broadcast %cst_52 : f32 to vector<16x16xf32>
    %67 = arith.addf %65, %66 : vector<16x16xf32>
    %cst_53 = arith.constant 4.000000e+00 : f32
    %68 = vector.broadcast %cst_53 : f32 to vector<16x16xf32>
    %69 = arith.cmpf ogt, %67, %68 : vector<16x16xf32>
    %cst_54 = arith.constant 0.000000e+00 : f32
    %70 = vector.broadcast %cst_54 : f32 to vector<16x16xf32>
    %71 = arith.select %69, %70, %67 : vector<16x16xi1>, vector<16x16xf32>
    %72 = arith.maximumf %39, %71 : vector<16x16xf32>
    %cst_55 = arith.constant 9.99999968E-21 : f32
    %73 = vector.broadcast %cst_55 : f32 to vector<16x16xf32>
    %74 = arith.addf %72, %73 : vector<16x16xf32>
    %75 = math.log %74 : vector<16x16xf32>
    %cst_56 = arith.constant 4.000000e-01 : f32
    %76 = vector.broadcast %cst_56 : f32 to vector<16x16xf32>
    %77 = arith.mulf %76, %75 : vector<16x16xf32>
    %78 = math.exp %77 : vector<16x16xf32>
    %c0_57 = arith.constant 0 : index
    %c0_58 = arith.constant 0 : index
    %c0_59 = arith.constant 0 : index
    %79 = vector.load %arg1[%c0_57, %c0_58, %c0_59] : memref<2x16x16xf32, #tpu.memory_space<vmem>>, vector<1x16x16xf32>
    %80 = vector.shape_cast %79 : vector<1x16x16xf32> to vector<16x16xf32>
    %c8_60 = arith.constant 8 : index
    %c128_61 = arith.constant 128 : index
    %81 = vector.load %arg5[%c8_60, %c128_61] : memref<32x272xf32, #tpu.memory_space<vmem>>, vector<16x16xf32>
    tpu.vector_store %arg5[%c8_60, %c128_61], %80 {strides = array<i32>} : memref<32x272xf32, #tpu.memory_space<vmem>>, vector<16x16xf32>,
    %c7_62 = arith.constant 7 : index
    %c127_63 = arith.constant 127 : index
    %82 = vector.load %arg5[%c7_62, %c127_63] : memref<32x272xf32, #tpu.memory_space<vmem>>, vector<16x16xf32>
    %c7_64 = arith.constant 7 : index
    %c128_65 = arith.constant 128 : index
    %83 = vector.load %arg5[%c7_64, %c128_65] : memref<32x272xf32, #tpu.memory_space<vmem>>, vector<16x16xf32>
    %c7_66 = arith.constant 7 : index
    %c129_67 = arith.constant 129 : index
    %84 = vector.load %arg5[%c7_66, %c129_67] : memref<32x272xf32, #tpu.memory_space<vmem>>, vector<16x16xf32>
    %c8_68 = arith.constant 8 : index
    %c127_69 = arith.constant 127 : index
    %85 = vector.load %arg5[%c8_68, %c127_69] : memref<32x272xf32, #tpu.memory_space<vmem>>, vector<16x16xf32>
    %c8_70 = arith.constant 8 : index
    %c129_71 = arith.constant 129 : index
    %86 = vector.load %arg5[%c8_70, %c129_71] : memref<32x272xf32, #tpu.memory_space<vmem>>, vector<16x16xf32>
    %c9_72 = arith.constant 9 : index
    %c127_73 = arith.constant 127 : index
    %87 = vector.load %arg5[%c9_72, %c127_73] : memref<32x272xf32, #tpu.memory_space<vmem>>, vector<16x16xf32>
    %c9_74 = arith.constant 9 : index
    %c128_75 = arith.constant 128 : index
    %88 = vector.load %arg5[%c9_74, %c128_75] : memref<32x272xf32, #tpu.memory_space<vmem>>, vector<16x16xf32>
    %c9_76 = arith.constant 9 : index
    %c129_77 = arith.constant 129 : index
    %89 = vector.load %arg5[%c9_76, %c129_77] : memref<32x272xf32, #tpu.memory_space<vmem>>, vector<16x16xf32>
    %90 = arith.subf %84, %87 : vector<16x16xf32>
    %91 = arith.subf %82, %89 : vector<16x16xf32>
    %92 = arith.subf %86, %85 : vector<16x16xf32>
    %93 = arith.subf %83, %88 : vector<16x16xf32>
    %94 = arith.subf %90, %91 : vector<16x16xf32>
    %cst_78 = arith.constant 2.000000e+00 : f32
    %95 = vector.broadcast %cst_78 : f32 to vector<16x16xf32>
    %96 = arith.mulf %95, %92 : vector<16x16xf32>
    %97 = arith.addf %94, %96 : vector<16x16xf32>
    %98 = arith.addf %90, %91 : vector<16x16xf32>
    %cst_79 = arith.constant 2.000000e+00 : f32
    %99 = vector.broadcast %cst_79 : f32 to vector<16x16xf32>
    %100 = arith.mulf %99, %93 : vector<16x16xf32>
    %101 = arith.addf %98, %100 : vector<16x16xf32>
    %102 = arith.mulf %97, %97 : vector<16x16xf32>
    %103 = arith.mulf %101, %101 : vector<16x16xf32>
    %104 = arith.addf %102, %103 : vector<16x16xf32>
    %cst_80 = arith.constant 1.000000e-10 : f32
    %105 = vector.broadcast %cst_80 : f32 to vector<16x16xf32>
    %106 = arith.addf %104, %105 : vector<16x16xf32>
    %cst_81 = arith.constant 4.000000e+00 : f32
    %107 = vector.broadcast %cst_81 : f32 to vector<16x16xf32>
    %108 = arith.cmpf ogt, %106, %107 : vector<16x16xf32>
    %cst_82 = arith.constant 0.000000e+00 : f32
    %109 = vector.broadcast %cst_82 : f32 to vector<16x16xf32>
    %110 = arith.select %108, %109, %106 : vector<16x16xi1>, vector<16x16xf32>
    %cst_83 = arith.constant 9.99999968E-21 : f32
    %111 = vector.broadcast %cst_83 : f32 to vector<16x16xf32>
    %112 = arith.addf %110, %111 : vector<16x16xf32>
    %113 = math.log %112 : vector<16x16xf32>
    %cst_84 = arith.constant 4.000000e-01 : f32
    %114 = vector.broadcast %cst_84 : f32 to vector<16x16xf32>
    %115 = arith.mulf %114, %113 : vector<16x16xf32>
    %116 = math.exp %115 : vector<16x16xf32>
    %117 = arith.subf %116, %78 : vector<16x16xf32>
    %118 = math.absf %117 : vector<16x16xf32>
    %119 = vector.shape_cast %118 : vector<16x16xf32> to vector<1x16x16xf32>
    %cst_85 = arith.constant dense<0.000000e+00> : vector<1xf32>
    %120 = vector.multi_reduction <add>, %119, %cst_85 [1, 2] : vector<1x16x16xf32> to vector<1xf32>
    %121 = vector.shape_cast %120 : vector<1xf32> to vector<1x1x1xf32>
    %122 = vector.extract %121[0, 0, 0] : f32 from vector<1x1x1xf32>
    %cst_86 = arith.constant 0.000000e+00 : f32
    %123 = arith.addf %cst_86, %122 : f32
    %c1 = arith.constant 1 : index
    %c0_87 = arith.constant 0 : index
    %c0_88 = arith.constant 0 : index
    %124 = vector.load %arg2[%c1, %c0_87, %c0_88] : memref<2x16x16xf32, #tpu.memory_space<vmem>>, vector<1x16x16xf32>
    %125 = vector.shape_cast %124 : vector<1x16x16xf32> to vector<16x16xf32>
    %c8_89 = arith.constant 8 : index
    %c128_90 = arith.constant 128 : index
    %126 = vector.load %arg5[%c8_89, %c128_90] : memref<32x272xf32, #tpu.memory_space<vmem>>, vector<16x16xf32>
    tpu.vector_store %arg5[%c8_89, %c128_90], %125 {strides = array<i32>} : memref<32x272xf32, #tpu.memory_space<vmem>>, vector<16x16xf32>,
    %c7_91 = arith.constant 7 : index
    %c127_92 = arith.constant 127 : index
    %127 = vector.load %arg5[%c7_91, %c127_92] : memref<32x272xf32, #tpu.memory_space<vmem>>, vector<16x16xf32>
    %c7_93 = arith.constant 7 : index
    %c128_94 = arith.constant 128 : index
    %128 = vector.load %arg5[%c7_93, %c128_94] : memref<32x272xf32, #tpu.memory_space<vmem>>, vector<16x16xf32>
    %c7_95 = arith.constant 7 : index
    %c129_96 = arith.constant 129 : index
    %129 = vector.load %arg5[%c7_95, %c129_96] : memref<32x272xf32, #tpu.memory_space<vmem>>, vector<16x16xf32>
    %c8_97 = arith.constant 8 : index
    %c127_98 = arith.constant 127 : index
    %130 = vector.load %arg5[%c8_97, %c127_98] : memref<32x272xf32, #tpu.memory_space<vmem>>, vector<16x16xf32>
    %c8_99 = arith.constant 8 : index
    %c129_100 = arith.constant 129 : index
    %131 = vector.load %arg5[%c8_99, %c129_100] : memref<32x272xf32, #tpu.memory_space<vmem>>, vector<16x16xf32>
    %c9_101 = arith.constant 9 : index
    %c127_102 = arith.constant 127 : index
    %132 = vector.load %arg5[%c9_101, %c127_102] : memref<32x272xf32, #tpu.memory_space<vmem>>, vector<16x16xf32>
    %c9_103 = arith.constant 9 : index
    %c128_104 = arith.constant 128 : index
    %133 = vector.load %arg5[%c9_103, %c128_104] : memref<32x272xf32, #tpu.memory_space<vmem>>, vector<16x16xf32>
    %c9_105 = arith.constant 9 : index
    %c129_106 = arith.constant 129 : index
    %134 = vector.load %arg5[%c9_105, %c129_106] : memref<32x272xf32, #tpu.memory_space<vmem>>, vector<16x16xf32>
    %135 = arith.subf %129, %132 : vector<16x16xf32>
    %136 = arith.subf %127, %134 : vector<16x16xf32>
    %137 = arith.subf %131, %130 : vector<16x16xf32>
    %138 = arith.subf %128, %133 : vector<16x16xf32>
    %139 = arith.subf %135, %136 : vector<16x16xf32>
    %cst_107 = arith.constant 2.000000e+00 : f32
    %140 = vector.broadcast %cst_107 : f32 to vector<16x16xf32>
    %141 = arith.mulf %140, %137 : vector<16x16xf32>
    %142 = arith.addf %139, %141 : vector<16x16xf32>
    %143 = arith.addf %135, %136 : vector<16x16xf32>
    %cst_108 = arith.constant 2.000000e+00 : f32
    %144 = vector.broadcast %cst_108 : f32 to vector<16x16xf32>
    %145 = arith.mulf %144, %138 : vector<16x16xf32>
    %146 = arith.addf %143, %145 : vector<16x16xf32>
    %147 = arith.mulf %142, %142 : vector<16x16xf32>
    %148 = arith.mulf %146, %146 : vector<16x16xf32>
    %149 = arith.addf %147, %148 : vector<16x16xf32>
    %cst_109 = arith.constant 1.000000e-10 : f32
    %150 = vector.broadcast %cst_109 : f32 to vector<16x16xf32>
    %151 = arith.addf %149, %150 : vector<16x16xf32>
    %cst_110 = arith.constant 4.000000e+00 : f32
    %152 = vector.broadcast %cst_110 : f32 to vector<16x16xf32>
    %153 = arith.cmpf ogt, %151, %152 : vector<16x16xf32>
    %cst_111 = arith.constant 0.000000e+00 : f32
    %154 = vector.broadcast %cst_111 : f32 to vector<16x16xf32>
    %155 = arith.select %153, %154, %151 : vector<16x16xi1>, vector<16x16xf32>
    %c1_112 = arith.constant 1 : index
    %c0_113 = arith.constant 0 : index
    %c0_114 = arith.constant 0 : index
    %156 = vector.load %arg3[%c1_112, %c0_113, %c0_114] : memref<2x16x16xf32, #tpu.memory_space<vmem>>, vector<1x16x16xf32>
    %157 = vector.shape_cast %156 : vector<1x16x16xf32> to vector<16x16xf32>
    %c8_115 = arith.constant 8 : index
    %c128_116 = arith.constant 128 : index
    %158 = vector.load %arg5[%c8_115, %c128_116] : memref<32x272xf32, #tpu.memory_space<vmem>>, vector<16x16xf32>
    tpu.vector_store %arg5[%c8_115, %c128_116], %157 {strides = array<i32>} : memref<32x272xf32, #tpu.memory_space<vmem>>, vector<16x16xf32>,
    %c7_117 = arith.constant 7 : index
    %c127_118 = arith.constant 127 : index
    %159 = vector.load %arg5[%c7_117, %c127_118] : memref<32x272xf32, #tpu.memory_space<vmem>>, vector<16x16xf32>
    %c7_119 = arith.constant 7 : index
    %c128_120 = arith.constant 128 : index
    %160 = vector.load %arg5[%c7_119, %c128_120] : memref<32x272xf32, #tpu.memory_space<vmem>>, vector<16x16xf32>
    %c7_121 = arith.constant 7 : index
    %c129_122 = arith.constant 129 : index
    %161 = vector.load %arg5[%c7_121, %c129_122] : memref<32x272xf32, #tpu.memory_space<vmem>>, vector<16x16xf32>
    %c8_123 = arith.constant 8 : index
    %c127_124 = arith.constant 127 : index
    %162 = vector.load %arg5[%c8_123, %c127_124] : memref<32x272xf32, #tpu.memory_space<vmem>>, vector<16x16xf32>
    %c8_125 = arith.constant 8 : index
    %c129_126 = arith.constant 129 : index
    %163 = vector.load %arg5[%c8_125, %c129_126] : memref<32x272xf32, #tpu.memory_space<vmem>>, vector<16x16xf32>
    %c9_127 = arith.constant 9 : index
    %c127_128 = arith.constant 127 : index
    %164 = vector.load %arg5[%c9_127, %c127_128] : memref<32x272xf32, #tpu.memory_space<vmem>>, vector<16x16xf32>
    %c9_129 = arith.constant 9 : index
    %c128_130 = arith.constant 128 : index
    %165 = vector.load %arg5[%c9_129, %c128_130] : memref<32x272xf32, #tpu.memory_space<vmem>>, vector<16x16xf32>
    %c9_131 = arith.constant 9 : index
    %c129_132 = arith.constant 129 : index
    %166 = vector.load %arg5[%c9_131, %c129_132] : memref<32x272xf32, #tpu.memory_space<vmem>>, vector<16x16xf32>
    %167 = arith.subf %161, %164 : vector<16x16xf32>
    %168 = arith.subf %159, %166 : vector<16x16xf32>
    %169 = arith.subf %163, %162 : vector<16x16xf32>
    %170 = arith.subf %160, %165 : vector<16x16xf32>
    %171 = arith.subf %167, %168 : vector<16x16xf32>
    %cst_133 = arith.constant 2.000000e+00 : f32
    %172 = vector.broadcast %cst_133 : f32 to vector<16x16xf32>
    %173 = arith.mulf %172, %169 : vector<16x16xf32>
    %174 = arith.addf %171, %173 : vector<16x16xf32>
    %175 = arith.addf %167, %168 : vector<16x16xf32>
    %cst_134 = arith.constant 2.000000e+00 : f32
    %176 = vector.broadcast %cst_134 : f32 to vector<16x16xf32>
    %177 = arith.mulf %176, %170 : vector<16x16xf32>
    %178 = arith.addf %175, %177 : vector<16x16xf32>
    %179 = arith.mulf %174, %174 : vector<16x16xf32>
    %180 = arith.mulf %178, %178 : vector<16x16xf32>
    %181 = arith.addf %179, %180 : vector<16x16xf32>
    %cst_135 = arith.constant 1.000000e-10 : f32
    %182 = vector.broadcast %cst_135 : f32 to vector<16x16xf32>
    %183 = arith.addf %181, %182 : vector<16x16xf32>
    %cst_136 = arith.constant 4.000000e+00 : f32
    %184 = vector.broadcast %cst_136 : f32 to vector<16x16xf32>
    %185 = arith.cmpf ogt, %183, %184 : vector<16x16xf32>
    %cst_137 = arith.constant 0.000000e+00 : f32
    %186 = vector.broadcast %cst_137 : f32 to vector<16x16xf32>
    %187 = arith.select %185, %186, %183 : vector<16x16xi1>, vector<16x16xf32>
    %188 = arith.maximumf %155, %187 : vector<16x16xf32>
    %cst_138 = arith.constant 9.99999968E-21 : f32
    %189 = vector.broadcast %cst_138 : f32 to vector<16x16xf32>
    %190 = arith.addf %188, %189 : vector<16x16xf32>
    %191 = math.log %190 : vector<16x16xf32>
    %cst_139 = arith.constant 4.000000e-01 : f32
    %192 = vector.broadcast %cst_139 : f32 to vector<16x16xf32>
    %193 = arith.mulf %192, %191 : vector<16x16xf32>
    %194 = math.exp %193 : vector<16x16xf32>
    %c1_140 = arith.constant 1 : index
    %c0_141 = arith.constant 0 : index
    %c0_142 = arith.constant 0 : index
    %195 = vector.load %arg1[%c1_140, %c0_141, %c0_142] : memref<2x16x16xf32, #tpu.memory_space<vmem>>, vector<1x16x16xf32>
    %196 = vector.shape_cast %195 : vector<1x16x16xf32> to vector<16x16xf32>
    %c8_143 = arith.constant 8 : index
    %c128_144 = arith.constant 128 : index
    %197 = vector.load %arg5[%c8_143, %c128_144] : memref<32x272xf32, #tpu.memory_space<vmem>>, vector<16x16xf32>
    tpu.vector_store %arg5[%c8_143, %c128_144], %196 {strides = array<i32>} : memref<32x272xf32, #tpu.memory_space<vmem>>, vector<16x16xf32>,
    %c7_145 = arith.constant 7 : index
    %c127_146 = arith.constant 127 : index
    %198 = vector.load %arg5[%c7_145, %c127_146] : memref<32x272xf32, #tpu.memory_space<vmem>>, vector<16x16xf32>
    %c7_147 = arith.constant 7 : index
    %c128_148 = arith.constant 128 : index
    %199 = vector.load %arg5[%c7_147, %c128_148] : memref<32x272xf32, #tpu.memory_space<vmem>>, vector<16x16xf32>
    %c7_149 = arith.constant 7 : index
    %c129_150 = arith.constant 129 : index
    %200 = vector.load %arg5[%c7_149, %c129_150] : memref<32x272xf32, #tpu.memory_space<vmem>>, vector<16x16xf32>
    %c8_151 = arith.constant 8 : index
    %c127_152 = arith.constant 127 : index
    %201 = vector.load %arg5[%c8_151, %c127_152] : memref<32x272xf32, #tpu.memory_space<vmem>>, vector<16x16xf32>
    %c8_153 = arith.constant 8 : index
    %c129_154 = arith.constant 129 : index
    %202 = vector.load %arg5[%c8_153, %c129_154] : memref<32x272xf32, #tpu.memory_space<vmem>>, vector<16x16xf32>
    %c9_155 = arith.constant 9 : index
    %c127_156 = arith.constant 127 : index
    %203 = vector.load %arg5[%c9_155, %c127_156] : memref<32x272xf32, #tpu.memory_space<vmem>>, vector<16x16xf32>
    %c9_157 = arith.constant 9 : index
    %c128_158 = arith.constant 128 : index
    %204 = vector.load %arg5[%c9_157, %c128_158] : memref<32x272xf32, #tpu.memory_space<vmem>>, vector<16x16xf32>
    %c9_159 = arith.constant 9 : index
    %c129_160 = arith.constant 129 : index
    %205 = vector.load %arg5[%c9_159, %c129_160] : memref<32x272xf32, #tpu.memory_space<vmem>>, vector<16x16xf32>
    %206 = arith.subf %200, %203 : vector<16x16xf32>
    %207 = arith.subf %198, %205 : vector<16x16xf32>
    %208 = arith.subf %202, %201 : vector<16x16xf32>
    %209 = arith.subf %199, %204 : vector<16x16xf32>
    %210 = arith.subf %206, %207 : vector<16x16xf32>
    %cst_161 = arith.constant 2.000000e+00 : f32
    %211 = vector.broadcast %cst_161 : f32 to vector<16x16xf32>
    %212 = arith.mulf %211, %208 : vector<16x16xf32>
    %213 = arith.addf %210, %212 : vector<16x16xf32>
    %214 = arith.addf %206, %207 : vector<16x16xf32>
    %cst_162 = arith.constant 2.000000e+00 : f32
    %215 = vector.broadcast %cst_162 : f32 to vector<16x16xf32>
    %216 = arith.mulf %215, %209 : vector<16x16xf32>
    %217 = arith.addf %214, %216 : vector<16x16xf32>
    %218 = arith.mulf %213, %213 : vector<16x16xf32>
    %219 = arith.mulf %217, %217 : vector<16x16xf32>
    %220 = arith.addf %218, %219 : vector<16x16xf32>
    %cst_163 = arith.constant 1.000000e-10 : f32
    %221 = vector.broadcast %cst_163 : f32 to vector<16x16xf32>
    %222 = arith.addf %220, %221 : vector<16x16xf32>
    %cst_164 = arith.constant 4.000000e+00 : f32
    %223 = vector.broadcast %cst_164 : f32 to vector<16x16xf32>
    %224 = arith.cmpf ogt, %222, %223 : vector<16x16xf32>
    %cst_165 = arith.constant 0.000000e+00 : f32
    %225 = vector.broadcast %cst_165 : f32 to vector<16x16xf32>
    %226 = arith.select %224, %225, %222 : vector<16x16xi1>, vector<16x16xf32>
    %cst_166 = arith.constant 9.99999968E-21 : f32
    %227 = vector.broadcast %cst_166 : f32 to vector<16x16xf32>
    %228 = arith.addf %226, %227 : vector<16x16xf32>
    %229 = math.log %228 : vector<16x16xf32>
    %cst_167 = arith.constant 4.000000e-01 : f32
    %230 = vector.broadcast %cst_167 : f32 to vector<16x16xf32>
    %231 = arith.mulf %230, %229 : vector<16x16xf32>
    %232 = math.exp %231 : vector<16x16xf32>
    %233 = arith.subf %232, %194 : vector<16x16xf32>
    %234 = math.absf %233 : vector<16x16xf32>
    %235 = vector.shape_cast %234 : vector<16x16xf32> to vector<1x16x16xf32>
    %cst_168 = arith.constant dense<0.000000e+00> : vector<1xf32>
    %236 = vector.multi_reduction <add>, %235, %cst_168 [1, 2] : vector<1x16x16xf32> to vector<1xf32>
    %237 = vector.shape_cast %236 : vector<1xf32> to vector<1x1x1xf32>
    %238 = vector.extract %237[0, 0, 0] : f32 from vector<1x1x1xf32>
    %239 = arith.addf %123, %238 : f32
    %240 = vector.broadcast %239 : f32 to vector<1x8x128xf32>
    %c0_169 = arith.constant 0 : index
    %c0_170 = arith.constant 0 : index
    %c0_171 = arith.constant 0 : index
    %241 = vector.load %arg4[%c0_169, %c0_170, %c0_171] : memref<1x8x128xf32, #tpu.memory_space<vmem>>, vector<1x8x128xf32>
    tpu.vector_store %arg4[%c0_169, %c0_170, %c0_171], %240 {strides = array<i32>} : memref<1x8x128xf32, #tpu.memory_space<vmem>>, vector<1x8x128xf32>,
    return
  }
  func.func @transform_0(%arg0: i32) -> (i32, i32, i32) {
    %c0_i32 = arith.constant 0 : i32
    %c0_i32_0 = arith.constant 0 : i32
    %c0_i32_1 = arith.constant 0 : i32
    return %arg0, %c0_i32, %c0_i32_0 : i32, i32, i32
  }
  func.func @transform_1(%arg0: i32) -> (i32, i32, i32) {
    %c0_i32 = arith.constant 0 : i32
    %c0_i32_0 = arith.constant 0 : i32
    %c0_i32_1 = arith.constant 0 : i32
    return %arg0, %c0_i32, %c0_i32_0 : i32, i32, i32
  }
  func.func @transform_2(%arg0: i32) -> (i32, i32, i32) {
    %c0_i32 = arith.constant 0 : i32
    %c0_i32_0 = arith.constant 0 : i32
    %c0_i32_1 = arith.constant 0 : i32
    return %arg0, %c0_i32, %c0_i32_0 : i32, i32, i32
  }
  func.func @transform_3(%arg0: i32) -> (i32, i32, i32) {
    %c0_i32 = arith.constant 0 : i32
    %c0_i32_0 = arith.constant 0 : i32
    %c0_i32_1 = arith.constant 0 : i32
    return %arg0, %c0_i32, %c0_i32_0 : i32, i32, i32
  }
}

</mosaic_0001>

<llo_original>
// kernel: tpu_custom_call.1
$region0: #{tpu_custom_call.1}
  #allocation0 [shape = 'u32[]', space=smem, size = 0x4, offset = 0x4, fixed_abs, tag = 'smem constant byte address 0x4 - core index']
  #allocation1 [shape = 'u32[144,128]{1,0:T(1,128)}', space=vmem, size = 0x12000, scoped, tag = 'internal scratch']
  #allocation2 [shape = 'f32[32,272]{1,0:T(8,128)}', space=vmem, size = 0xc000, scoped, tag = 'scratch operand']
  %s0 = inlined_call_operand.hbm [shape: f32[2,16,16], index: 0, kind: input, shape index: {}]
  %s1 = inlined_call_operand.hbm [shape: f32[2,16,16], index: 1, kind: input, shape index: {}]
  %s2 = inlined_call_operand.hbm [shape: f32[2,16,16], index: 2, kind: input, shape index: {}]
  %s3 = inlined_call_operand.hbm [shape: f32[1,8,128], index: 3, kind: output, shape index: {}]
  %s4 = sld [smem:[#allocation0]]
  $region34: #{tpu_custom_call.1} parent=0
    _
  %s6 = ssub.s32 1, %s4
  %s7 = scalar_select 0, %s6, %s4
  $region1: #{tpu_custom_call.1} parent=0
    #allocation3 [shape = 'u8[16384]{0}', space=vmem, size = 0x4000, scoped, tag = 'input window, operand 0, single buffered']
    #allocation4 [shape = 's32[1]{0}', space=sflag, size = 0x4, scoped, tag = 'scoped memory for tpu_custom_call.1']
    #allocation5 [shape = 's32[1]{0}', space=sflag, size = 0x4, scoped, tag = 'scoped memory for tpu_custom_call.1']
    #allocation6 [shape = 'u8[16384]{0}', space=vmem, size = 0x4000, scoped, tag = 'input window, operand 1, single buffered']
    #allocation7 [shape = 's32[1]{0}', space=sflag, size = 0x4, scoped, tag = 'scoped memory for tpu_custom_call.1']
    #allocation8 [shape = 'u8[16384]{0}', space=vmem, size = 0x4000, scoped, tag = 'input window, operand 2, single buffered']
    #allocation9 [shape = 'u8[4096]{0}', space=vmem, size = 0x1000, scoped, tag = 'output window, operand 0, single buffered']
    %8 = vsyncpa [#allocation4], 0
    %9 = vsyncpa [#allocation7], 0
    %10 = vsyncpa [#allocation5], 0
    // Predicated region
    $region2: #{tpu_custom_call.1} parent=1 // pred_check
      _
    $region3: #{tpu_custom_call.1} parent=1 // pred_check_branch
      %12 = sbr.rel (0) target = $region5
    $region4: #{tpu_custom_call.1} parent=1 // pred_region
      %s14 = ssub.s32 512, 512
      %15 = vsyncadd [#allocation4], %s14
      %s16 = sshll.u32 [#allocation3], 4
      %s17 = int_to_ptr.vmem [resolvable:$true] %s16
      %22 = dma.hbm_to_vmem [thread:$0]  %s0, 512, %s17, [#allocation4], 128, 128, 8
    $region5: #{tpu_custom_call.1} parent=1 // pred_fallthru
      _
    // Predicated region
    $region6: #{tpu_custom_call.1} parent=1 // pred_check
      _
    $region7: #{tpu_custom_call.1} parent=1 // pred_check_branch
      %24 = sbr.rel (0) target = $region9
    $region8: #{tpu_custom_call.1} parent=1 // pred_region
      %s26 = ssub.s32 512, 512
      %27 = vsyncadd [#allocation7], %s26
      %s28 = sshll.u32 [#allocation6], 4
      %s29 = int_to_ptr.vmem [resolvable:$true] %s28
      %34 = dma.hbm_to_vmem [thread:$0]  %s1, 512, %s29, [#allocation7], 128, 128, 8
    $region9: #{tpu_custom_call.1} parent=1 // pred_fallthru
      _
    // Predicated region
    $region10: #{tpu_custom_call.1} parent=1 // pred_check
      _
    $region11: #{tpu_custom_call.1} parent=1 // pred_check_branch
      %36 = sbr.rel (0) target = $region13
    $region12: #{tpu_custom_call.1} parent=1 // pred_region
      %s38 = ssub.s32 512, 512
      %39 = vsyncadd [#allocation7], %s38
      %s40 = sshll.u32 [#allocation8], 4
      %s41 = int_to_ptr.vmem [resolvable:$true] %s40
      %46 = dma.hbm_to_vmem [thread:$0]  %s2, 512, %s41, [#allocation7], 128, 128, 8
    $region13: #{tpu_custom_call.1} parent=1 // pred_fallthru
      _
    // Predicated region
    $region14: #{tpu_custom_call.1} parent=1 // pred_check
      _
    $region15: #{tpu_custom_call.1} parent=1 // pred_check_branch
      %48 = sbr.rel (0) target = $region17
    $region16: #{tpu_custom_call.1} parent=1 // pred_region
      %49 = dma.done [#allocation4], 512
    $region17: #{tpu_custom_call.1} parent=1 // pred_fallthru
      _
    // Predicated region
    $region18: #{tpu_custom_call.1} parent=1 // pred_check
      _
    $region19: #{tpu_custom_call.1} parent=1 // pred_check_branch
      %51 = sbr.rel (0) target = $region21
    $region20: #{tpu_custom_call.1} parent=1 // pred_region
      %52 = dma.done [#allocation7], 512
    $region21: #{tpu_custom_call.1} parent=1 // pred_fallthru
      _
    // Predicated region
    $region22: #{tpu_custom_call.1} parent=1 // pred_check
      _
    $region23: #{tpu_custom_call.1} parent=1 // pred_check_branch
      %54 = sbr.rel (0) target = $region25
    $region24: #{tpu_custom_call.1} parent=1 // pred_region
      %55 = dma.done [#allocation7], 512
    $region25: #{tpu_custom_call.1} parent=1 // pred_fallthru
      _
    %56 = vst [vmem:[#allocation2] sm:$0xff] 0.0
    %57 = vst [vmem:[#allocation2 + $0x8] sm:$0xff] 0.0
    %vm58 = vcmask 130048
    %59 = vst.msk [vmem:[#allocation2 + $0x10] sm:$0xff] %vm58, 0.0
    %60 = vst [vmem:[#allocation2 + $0x48] sm:$0xff] 0.0
    %61 = vst [vmem:[#allocation2 + $0x50] sm:$0xff] 0.0
    %62 = vst.msk [vmem:[#allocation2 + $0x58] sm:$0xff] %vm58, 0.0
    %63 = vst [vmem:[#allocation2] sm:$0xff] 0.0
    %64 = vst [vmem:[#allocation2 + $0x18] sm:$0xff] 0.0
    %65 = vst [vmem:[#allocation2 + $0x30] sm:$0xff] 0.0
    %66 = vst [vmem:[#allocation2 + $0x48] sm:$0xff] 0.0
    %67 = vst [vmem:[#allocation2 + $0x8] sm:$0xff] 0.0
    %68 = vst.msk [vmem:[#allocation2 + $0x10] sm:$0xff] %vm58, 0.0
    %69 = vst [vmem:[#allocation2 + $0x20] sm:$0xff] 0.0
    %70 = vst.msk [vmem:[#allocation2 + $0x28] sm:$0xff] %vm58, 0.0
    %71 = vst [vmem:[#allocation2 + $0x38] sm:$0xff] 0.0
    %72 = vst.msk [vmem:[#allocation2 + $0x40] sm:$0xff] %vm58, 0.0
    %73 = vst [vmem:[#allocation2 + $0x50] sm:$0xff] 0.0
    %74 = vst.msk [vmem:[#allocation2 + $0x58] sm:$0xff] %vm58, 0.0
    %v75 = vld [vmem:[#allocation6] sm:$0xff]
    %v76 = vld [vmem:[#allocation6 + $0x8] sm:$0xff]
    %77 = vst.msk [vmem:[#allocation2 + $0x20] sm:$0xff] %vm58, %v75
    %78 = vst.msk [vmem:[#allocation2 + $0x38] sm:$0xff] %vm58, %v76
    %v79 = vld [vmem:[#allocation2] sm:$0x80]
    %v80 = vld [vmem:[#allocation2 + $0x8] sm:$0x80]
    %v81 = vld [vmem:[#allocation2 + $0x18] sm:$0xff]
    %v82 = vld [vmem:[#allocation2 + $0x20] sm:$0xff]
    %v83 = vld [vmem:[#allocation2 + $0x30] sm:$0x7f]
    %v84 = vld [vmem:[#allocation2 + $0x38] sm:$0x7f]
    %v85 = vld [vmem:[#allocation2 + $0x30] sm:$0xff]
    %v86 = vld [vmem:[#allocation2 + $0x38] sm:$0xff]
    %v87 = vld [vmem:[#allocation2 + $0x18] sm:$0xfe]
    %v88 = vld [vmem:[#allocation2 + $0x20] sm:$0xfe]
    %v89 = vld [vmem:[#allocation2 + $0x48] sm:$0x1]
    %v90 = vld [vmem:[#allocation2 + $0x50] sm:$0x1]
    %vm97 = vcmask 1045504
    %v98 = vrot.slane %v87, 2
    %v99 = vrot.slane %v88, 2
    %v100 = vrot.slane %v85, 2
    %v101 = vsel %vm97, %v98, %v100
    %v102 = vrot.slane %v86, 2
    %v103 = vsel %vm97, %v99, %v102
    %v104 = vrot.slane %v89, 2
    %v105 = vsel %vm97, %v100, %v104
    %v106 = vrot.slane %v90, 2
    %v107 = vsel %vm97, %v102, %v106
    %108 = vrot.lane.b32.xlu0 %v98, 2
    %v109 = vpop.permute.xlu0 %108
    %110 = vrot.lane.b32.xlu0 %v99, 2
    %v111 = vpop.permute.xlu0 %110
    %112 = vrot.lane.b32.xlu0 %v101, 2
    %v113 = vpop.permute.xlu0 %112
    %114 = vrot.lane.b32.xlu0 %v103, 2
    %v115 = vpop.permute.xlu0 %114
    %116 = vrot.lane.b32.xlu0 %v105, 2
    %v117 = vpop.permute.xlu0 %116
    %118 = vrot.lane.b32.xlu0 %v107, 2
    %v119 = vpop.permute.xlu0 %118
    %vm120 = vcmask 15360
    %v121 = vsel %vm120, %v109, %v111
    %v122 = vsel %vm120, %v113, %v115
    %v123 = vsel %vm120, %v117, %v119
    %v127 = vsub.f32 %v80, %v121
    %v128 = vsub.f32 %v82, %v122
    %v129 = vsub.f32 %v84, %v123
    %130 = vrot.lane.b32.xlu0 %v99, 126
    %v131 = vpop.permute.xlu0 %130
    %132 = vrot.lane.b32.xlu0 %v103, 126
    %v133 = vpop.permute.xlu0 %132
    %134 = vrot.lane.b32.xlu0 %v107, 126
    %v135 = vpop.permute.xlu0 %134
    %v139 = vsub.f32 %v79, %v131
    %v140 = vsub.f32 %v80, %v131
    %v141 = vsub.f32 %v81, %v133
    %v142 = vsub.f32 %v82, %v133
    %v143 = vsub.f32 %v83, %v135
    %v144 = vsub.f32 %v84, %v135
    %147 = vrot.lane.b32.xlu0 %v81, 2
    %v148 = vpop.permute.xlu0 %147
    %149 = vrot.lane.b32.xlu0 %v82, 2
    %v150 = vpop.permute.xlu0 %149
    %151 = vrot.lane.b32.xlu0 %v85, 2
    %v152 = vpop.permute.xlu0 %151
    %153 = vrot.lane.b32.xlu0 %v86, 2
    %v154 = vpop.permute.xlu0 %153
    %v155 = vsel %vm120, %v148, %v150
    %v156 = vsel %vm120, %v152, %v154
    %v159 = vsub.f32 %v82, %v155
    %v160 = vsub.f32 %v86, %v156
    %v164 = vsub.f32 %v80, %v99
    %v165 = vsub.f32 %v82, %v103
    %v166 = vsub.f32 %v84, %v107
    %173 = vrot.lane.b32.xlu0 %v139, 2
    %v174 = vpop.permute.xlu0 %173
    %175 = vrot.lane.b32.xlu0 %v140, 2
    %v176 = vpop.permute.xlu0 %175
    %177 = vrot.lane.b32.xlu0 %v141, 2
    %v178 = vpop.permute.xlu0 %177
    %179 = vrot.lane.b32.xlu0 %v142, 2
    %v180 = vpop.permute.xlu0 %179
    %181 = vrot.lane.b32.xlu0 %v143, 2
    %v182 = vpop.permute.xlu0 %181
    %183 = vrot.lane.b32.xlu0 %v144, 2
    %v184 = vpop.permute.xlu0 %183
    %v185 = vsel %vm120, %v174, %v176
    %v186 = vsel %vm120, %v178, %v180
    %v187 = vsel %vm120, %v182, %v184
    %v191 = vsub.f32 %v127, %v185
    %v192 = vsub.f32 %v128, %v186
    %v193 = vsub.f32 %v129, %v187
    %v194 = vmul.f32 %v159, 2.0
    %v195 = vmul.f32 %v160, 2.0
    %vm198 = vcmask 1046528
    %v199 = vrot.slane %v194, 1
    %v200 = vrot.slane %v195, 1
    %v201 = vsel %vm198, %v199, %v200
    %v205 = vadd.f32 %v191, %v199
    %v206 = vadd.f32 %v192, %v201
    %v207 = vadd.f32 %v193, %v200
    %v208 = vadd.f32 %v127, %v185
    %v209 = vadd.f32 %v128, %v186
    %v210 = vadd.f32 %v129, %v187
    %v211 = vmul.f32 %v164, 2.0
    %v212 = vmul.f32 %v165, 2.0
    %v213 = vmul.f32 %v166, 2.0
    %217 = vrot.lane.b32.xlu0 %v211, 1
    %v218 = vpop.permute.xlu0 %217
    %219 = vrot.lane.b32.xlu0 %v212, 1
    %v220 = vpop.permute.xlu0 %219
    %221 = vrot.lane.b32.xlu0 %v213, 1
    %v222 = vpop.permute.xlu0 %221
    %v226 = vadd.f32 %v208, %v218
    %v227 = vadd.f32 %v209, %v220
    %v228 = vadd.f32 %v210, %v222
    %v229 = vmul.f32 %v205, %v205
    %v230 = vmul.f32 %v206, %v206
    %v231 = vmul.f32 %v207, %v207
    %v232 = vmul.f32 %v226, %v226
    %v233 = vmul.f32 %v227, %v227
    %v234 = vmul.f32 %v228, %v228
    %v235 = vadd.f32 %v229, %v232
    %v236 = vadd.f32 %v230, %v233
    %v237 = vadd.f32 %v231, %v234
    %v238 = vadd.f32 %v235, 1e-10
    %v239 = vadd.f32 %v236, 1e-10
    %v240 = vadd.f32 %v237, 1e-10
    %vm241 = vcmp.gt.f32.partialorder %v238, 4.0
    %vm242 = vcmp.gt.f32.partialorder %v239, 4.0
    %vm243 = vcmp.gt.f32.partialorder %v240, 4.0
    %v244 = vsel %vm241, 0.0, %v238
    %v245 = vsel %vm242, 0.0, %v239
    %v246 = vsel %vm243, 0.0, %v240
    %v247 = vld [vmem:[#allocation8] sm:$0xff]
    %v248 = vld [vmem:[#allocation8 + $0x8] sm:$0xff]
    %249 = vst.msk [vmem:[#allocation2 + $0x20] sm:$0xff] %vm58, %v247
    %250 = vst.msk [vmem:[#allocation2 + $0x38] sm:$0xff] %vm58, %v248
    %v251 = vld [vmem:[#allocation2] sm:$0x80]
    %v252 = vld [vmem:[#allocation2 + $0x8] sm:$0x80]
    %v253 = vld [vmem:[#allocation2 + $0x18] sm:$0xff]
    %v254 = vld [vmem:[#allocation2 + $0x20] sm:$0xff]
    %v255 = vld [vmem:[#allocation2 + $0x30] sm:$0x7f]
    %v256 = vld [vmem:[#allocation2 + $0x38] sm:$0x7f]
    %v257 = vld [vmem:[#allocation2 + $0x30] sm:$0xff]
    %v258 = vld [vmem:[#allocation2 + $0x38] sm:$0xff]
    %v259 = vld [vmem:[#allocation2 + $0x18] sm:$0xfe]
    %v260 = vld [vmem:[#allocation2 + $0x20] sm:$0xfe]
    %v261 = vld [vmem:[#allocation2 + $0x48] sm:$0x1]
    %v262 = vld [vmem:[#allocation2 + $0x50] sm:$0x1]
    %v269 = vrot.slane %v259, 2
    %v270 = vrot.slane %v260, 2
    %v271 = vrot.slane %v257, 2
    %v272 = vsel %vm97, %v269, %v271
    %v273 = vrot.slane %v258, 2
    %v274 = vsel %vm97, %v270, %v273
    %v275 = vrot.slane %v261, 2
    %v276 = vsel %vm97, %v271, %v275
    %v277 = vrot.slane %v262, 2
    %v278 = vsel %vm97, %v273, %v277
    %279 = vrot.lane.b32.xlu0 %v269, 2
    %v280 = vpop.permute.xlu0 %279
    %281 = vrot.lane.b32.xlu0 %v270, 2
    %v282 = vpop.permute.xlu0 %281
    %283 = vrot.lane.b32.xlu0 %v272, 2
    %v284 = vpop.permute.xlu0 %283
    %285 = vrot.lane.b32.xlu0 %v274, 2
    %v286 = vpop.permute.xlu0 %285
    %287 = vrot.lane.b32.xlu0 %v276, 2
    %v288 = vpop.permute.xlu0 %287
    %289 = vrot.lane.b32.xlu0 %v278, 2
    %v290 = vpop.permute.xlu0 %289
    %v291 = vsel %vm120, %v280, %v282
    %v292 = vsel %vm120, %v284, %v286
    %v293 = vsel %vm120, %v288, %v290
    %v297 = vsub.f32 %v252, %v291
    %v298 = vsub.f32 %v254, %v292
    %v299 = vsub.f32 %v256, %v293
    %300 = vrot.lane.b32.xlu0 %v270, 126
    %v301 = vpop.permute.xlu0 %300
    %302 = vrot.lane.b32.xlu0 %v274, 126
    %v303 = vpop.permute.xlu0 %302
    %304 = vrot.lane.b32.xlu0 %v278, 126
    %v305 = vpop.permute.xlu0 %304
    %v309 = vsub.f32 %v251, %v301
    %v310 = vsub.f32 %v252, %v301
    %v311 = vsub.f32 %v253, %v303
    %v312 = vsub.f32 %v254, %v303
    %v313 = vsub.f32 %v255, %v305
    %v314 = vsub.f32 %v256, %v305
    %317 = vrot.lane.b32.xlu0 %v253, 2
    %v318 = vpop.permute.xlu0 %317
    %319 = vrot.lane.b32.xlu0 %v254, 2
    %v320 = vpop.permute.xlu0 %319
    %321 = vrot.lane.b32.xlu0 %v257, 2
    %v322 = vpop.permute.xlu0 %321
    %323 = vrot.lane.b32.xlu0 %v258, 2
    %v324 = vpop.permute.xlu0 %323
    %v325 = vsel %vm120, %v318, %v320
    %v326 = vsel %vm120, %v322, %v324
    %v329 = vsub.f32 %v254, %v325
    %v330 = vsub.f32 %v258, %v326
    %v334 = vsub.f32 %v252, %v270
    %v335 = vsub.f32 %v254, %v274
    %v336 = vsub.f32 %v256, %v278
    %343 = vrot.lane.b32.xlu0 %v309, 2
    %v344 = vpop.permute.xlu0 %343
    %345 = vrot.lane.b32.xlu0 %v310, 2
    %v346 = vpop.permute.xlu0 %345
    %347 = vrot.lane.b32.xlu0 %v311, 2
    %v348 = vpop.permute.xlu0 %347
    %349 = vrot.lane.b32.xlu0 %v312, 2
    %v350 = vpop.permute.xlu0 %349
    %351 = vrot.lane.b32.xlu0 %v313, 2
    %v352 = vpop.permute.xlu0 %351
    %353 = vrot.lane.b32.xlu0 %v314, 2
    %v354 = vpop.permute.xlu0 %353
    %v355 = vsel %vm120, %v344, %v346
    %v356 = vsel %vm120, %v348, %v350
    %v357 = vsel %vm120, %v352, %v354
    %v361 = vsub.f32 %v297, %v355
    %v362 = vsub.f32 %v298, %v356
    %v363 = vsub.f32 %v299, %v357
    %v364 = vmul.f32 %v329, 2.0
    %v365 = vmul.f32 %v330, 2.0
    %v368 = vrot.slane %v364, 1
    %v369 = vrot.slane %v365, 1
    %v370 = vsel %vm198, %v368, %v369
    %v374 = vadd.f32 %v361, %v368
    %v375 = vadd.f32 %v362, %v370
    %v376 = vadd.f32 %v363, %v369
    %v377 = vadd.f32 %v297, %v355
    %v378 = vadd.f32 %v298, %v356
    %v379 = vadd.f32 %v299, %v357
    %v380 = vmul.f32 %v334, 2.0
    %v381 = vmul.f32 %v335, 2.0
    %v382 = vmul.f32 %v336, 2.0
    %386 = vrot.lane.b32.xlu0 %v380, 1
    %v387 = vpop.permute.xlu0 %386
    %388 = vrot.lane.b32.xlu0 %v381, 1
    %v389 = vpop.permute.xlu0 %388
    %390 = vrot.lane.b32.xlu0 %v382, 1
    %v391 = vpop.permute.xlu0 %390
    %v395 = vadd.f32 %v377, %v387
    %v396 = vadd.f32 %v378, %v389
    %v397 = vadd.f32 %v379, %v391
    %v398 = vmul.f32 %v374, %v374
    %v399 = vmul.f32 %v375, %v375
    %v400 = vmul.f32 %v376, %v376
    %v401 = vmul.f32 %v395, %v395
    %v402 = vmul.f32 %v396, %v396
    %v403 = vmul.f32 %v397, %v397
    %v404 = vadd.f32 %v398, %v401
    %v405 = vadd.f32 %v399, %v402
    %v406 = vadd.f32 %v400, %v403
    %v407 = vadd.f32 %v404, 1e-10
    %v408 = vadd.f32 %v405, 1e-10
    %v409 = vadd.f32 %v406, 1e-10
    %vm410 = vcmp.gt.f32.partialorder %v407, 4.0
    %vm411 = vcmp.gt.f32.partialorder %v408, 4.0
    %vm412 = vcmp.gt.f32.partialorder %v409, 4.0
    %v413 = vsel %vm410, 0.0, %v407
    %v414 = vsel %vm411, 0.0, %v408
    %v415 = vsel %vm412, 0.0, %v409
    %v416 = vmax.f32 %v244, %v413
    %v417 = vmax.f32 %v245, %v414
    %v418 = vmax.f32 %v246, %v415
    %v419 = vadd.f32 %v416, 1e-20
    %v420 = vadd.f32 %v417, 1e-20
    %v421 = vadd.f32 %v418, 1e-20
    %v422 = vlog2.pop %v419
    %v423 = vmul.f32 %v422, 0.6931472
    %v424 = vlog2.pop %v420
    %v425 = vmul.f32 %v424, 0.6931472
    %v426 = vlog2.pop %v421
    %v427 = vmul.f32 %v426, 0.6931472
    %v428 = vmul.f32 %v423, 0.4
    %v429 = vmul.f32 %v425, 0.4
    %v430 = vmul.f32 %v427, 0.4
    %v431 = vmul.f32 %v428, 1.442695
    %v432 = vpow.pop %v431
    %v433 = vmul.f32 %v429, 1.442695
    %v434 = vpow.pop %v433
    %v435 = vmul.f32 %v430, 1.442695
    %v436 = vpow.pop %v435
    %v437 = vld [vmem:[#allocation3] sm:$0xff]
    %v438 = vld [vmem:[#allocation3 + $0x8] sm:$0xff]
    %439 = vst.msk [vmem:[#allocation2 + $0x20] sm:$0xff] %vm58, %v437
    %440 = vst.msk [vmem:[#allocation2 + $0x38] sm:$0xff] %vm58, %v438
    %v441 = vld [vmem:[#allocation2] sm:$0x80]
    %v442 = vld [vmem:[#allocation2 + $0x8] sm:$0x80]
    %v443 = vld [vmem:[#allocation2 + $0x18] sm:$0xff]
    %v444 = vld [vmem:[#allocation2 + $0x20] sm:$0xff]
    %v445 = vld [vmem:[#allocation2 + $0x30] sm:$0x7f]
    %v446 = vld [vmem:[#allocation2 + $0x38] sm:$0x7f]
    %v447 = vld [vmem:[#allocation2 + $0x30] sm:$0xff]
    %v448 = vld [vmem:[#allocation2 + $0x38] sm:$0xff]
    %v449 = vld [vmem:[#allocation2 + $0x18] sm:$0xfe]
    %v450 = vld [vmem:[#allocation2 + $0x20] sm:$0xfe]
    %v451 = vld [vmem:[#allocation2 + $0x48] sm:$0x1]
    %v452 = vld [vmem:[#allocation2 + $0x50] sm:$0x1]
    %v459 = vrot.slane %v449, 2
    %v460 = vrot.slane %v450, 2
    %v461 = vrot.slane %v447, 2
    %v462 = vsel %vm97, %v459, %v461
    %v463 = vrot.slane %v448, 2
    %v464 = vsel %vm97, %v460, %v463
    %v465 = vrot.slane %v451, 2
    %v466 = vsel %vm97, %v461, %v465
    %v467 = vrot.slane %v452, 2
    %v468 = vsel %vm97, %v463, %v467
    %469 = vrot.lane.b32.xlu0 %v459, 2
    %v470 = vpop.permute.xlu0 %469
    %471 = vrot.lane.b32.xlu0 %v460, 2
    %v472 = vpop.permute.xlu0 %471
    %473 = vrot.lane.b32.xlu0 %v462, 2
    %v474 = vpop.permute.xlu0 %473
    %475 = vrot.lane.b32.xlu0 %v464, 2
    %v476 = vpop.permute.xlu0 %475
    %477 = vrot.lane.b32.xlu0 %v466, 2
    %v478 = vpop.permute.xlu0 %477
    %479 = vrot.lane.b32.xlu0 %v468, 2
    %v480 = vpop.permute.xlu0 %479
    %v481 = vsel %vm120, %v470, %v472
    %v482 = vsel %vm120, %v474, %v476
    %v483 = vsel %vm120, %v478, %v480
    %v487 = vsub.f32 %v442, %v481
    %v488 = vsub.f32 %v444, %v482
    %v489 = vsub.f32 %v446, %v483
    %490 = vrot.lane.b32.xlu0 %v460, 126
    %v491 = vpop.permute.xlu0 %490
    %492 = vrot.lane.b32.xlu0 %v464, 126
    %v493 = vpop.permute.xlu0 %492
    %494 = vrot.lane.b32.xlu0 %v468, 126
    %v495 = vpop.permute.xlu0 %494
    %v499 = vsub.f32 %v441, %v491
    %v500 = vsub.f32 %v442, %v491
    %v501 = vsub.f32 %v443, %v493
    %v502 = vsub.f32 %v444, %v493
    %v503 = vsub.f32 %v445, %v495
    %v504 = vsub.f32 %v446, %v495
    %507 = vrot.lane.b32.xlu0 %v443, 2
    %v508 = vpop.permute.xlu0 %507
    %509 = vrot.lane.b32.xlu0 %v444, 2
    %v510 = vpop.permute.xlu0 %509
    %511 = vrot.lane.b32.xlu0 %v447, 2
    %v512 = vpop.permute.xlu0 %511
    %513 = vrot.lane.b32.xlu0 %v448, 2
    %v514 = vpop.permute.xlu0 %513
    %v515 = vsel %vm120, %v508, %v510
    %v516 = vsel %vm120, %v512, %v514
    %v519 = vsub.f32 %v444, %v515
    %v520 = vsub.f32 %v448, %v516
    %v524 = vsub.f32 %v442, %v460
    %v525 = vsub.f32 %v444, %v464
    %v526 = vsub.f32 %v446, %v468
    %533 = vrot.lane.b32.xlu0 %v499, 2
    %v534 = vpop.permute.xlu0 %533
    %535 = vrot.lane.b32.xlu0 %v500, 2
    %v536 = vpop.permute.xlu0 %535
    %537 = vrot.lane.b32.xlu0 %v501, 2
    %v538 = vpop.permute.xlu0 %537
    %539 = vrot.lane.b32.xlu0 %v502, 2
    %v540 = vpop.permute.xlu0 %539
    %541 = vrot.lane.b32.xlu0 %v503, 2
    %v542 = vpop.permute.xlu0 %541
    %543 = vrot.lane.b32.xlu0 %v504, 2
    %v544 = vpop.permute.xlu0 %543
    %v545 = vsel %vm120, %v534, %v536
    %v546 = vsel %vm120, %v538, %v540
    %v547 = vsel %vm120, %v542, %v544
    %v551 = vsub.f32 %v487, %v545
    %v552 = vsub.f32 %v488, %v546
    %v553 = vsub.f32 %v489, %v547
    %v554 = vmul.f32 %v519, 2.0
    %v555 = vmul.f32 %v520, 2.0
    %v558 = vrot.slane %v554, 1
    %v559 = vrot.slane %v555, 1
    %v560 = vsel %vm198, %v558, %v559
    %v564 = vadd.f32 %v551, %v558
    %v565 = vadd.f32 %v552, %v560
    %v566 = vadd.f32 %v553, %v559
    %v567 = vadd.f32 %v487, %v545
    %v568 = vadd.f32 %v488, %v546
    %v569 = vadd.f32 %v489, %v547
    %v570 = vmul.f32 %v524, 2.0
    %v571 = vmul.f32 %v525, 2.0
    %v572 = vmul.f32 %v526, 2.0
    %576 = vrot.lane.b32.xlu0 %v570, 1
    %v577 = vpop.permute.xlu0 %576
    %578 = vrot.lane.b32.xlu0 %v571, 1
    %v579 = vpop.permute.xlu0 %578
    %580 = vrot.lane.b32.xlu0 %v572, 1
    %v581 = vpop.permute.xlu0 %580
    %v585 = vadd.f32 %v567, %v577
    %v586 = vadd.f32 %v568, %v579
    %v587 = vadd.f32 %v569, %v581
    %v588 = vmul.f32 %v564, %v564
    %v589 = vmul.f32 %v565, %v565
    %v590 = vmul.f32 %v566, %v566
    %v591 = vmul.f32 %v585, %v585
    %v592 = vmul.f32 %v586, %v586
    %v593 = vmul.f32 %v587, %v587
    %v594 = vadd.f32 %v588, %v591
    %v595 = vadd.f32 %v589, %v592
    %v596 = vadd.f32 %v590, %v593
    %v597 = vadd.f32 %v594, 1e-10
    %v598 = vadd.f32 %v595, 1e-10
    %v599 = vadd.f32 %v596, 1e-10
    %vm600 = vcmp.gt.f32.partialorder %v597, 4.0
    %vm601 = vcmp.gt.f32.partialorder %v598, 4.0
    %vm602 = vcmp.gt.f32.partialorder %v599, 4.0
    %v603 = vsel %vm600, 0.0, %v597
    %v604 = vsel %vm601, 0.0, %v598
    %v605 = vsel %vm602, 0.0, %v599
    %v606 = vadd.f32 %v603, 1e-20
    %v607 = vadd.f32 %v604, 1e-20
    %v608 = vadd.f32 %v605, 1e-20
    %v609 = vlog2.pop %v606
    %v610 = vmul.f32 %v609, 0.6931472
    %v611 = vlog2.pop %v607
    %v612 = vmul.f32 %v611, 0.6931472
    %v613 = vlog2.pop %v608
    %v614 = vmul.f32 %v613, 0.6931472
    %v615 = vmul.f32 %v610, 0.4
    %v616 = vmul.f32 %v612, 0.4
    %v617 = vmul.f32 %v614, 0.4
    %v618 = vmul.f32 %v615, 1.442695
    %v619 = vpow.pop %v618
    %v620 = vmul.f32 %v616, 1.442695
    %v621 = vpow.pop %v620
    %v622 = vmul.f32 %v617, 1.442695
    %v623 = vpow.pop %v622
    %v624 = vsub.f32 %v619, %v432
    %v625 = vsub.f32 %v621, %v434
    %v626 = vsub.f32 %v623, %v436
    %v627 = vand.u32 2147483647, %v624
    %v628 = vand.u32 2147483647, %v625
    %v629 = vand.u32 2147483647, %v626
    %vm633 = vcmask 1040384
    %v634 = vrot.slane %v627, 7
    %v635 = vrot.slane %v628, 7
    %v636 = vsel %vm633, %v634, %v635
    %v637 = vrot.slane %v629, 7
    %v638 = vsel %vm633, %v635, %v637
    %639 = vrot.lane.b32.xlu0 %v636, 127
    %v640 = vpop.permute.xlu0 %639
    %641 = vrot.lane.b32.xlu0 %v638, 127
    %v642 = vpop.permute.xlu0 %641
    %v645 = vsel %vm58, %v640, 0.0
    %v646 = vsel %vm58, %v642, 0.0
    %v647 = vadd.f32 %v645, %v646
    %648 = vadd.xlane.f32.xlu0 %v647
    %v649 = vpop.xlane.xlu0 %648
    %v650 = vrot.slane %v649, 4
    %v651 = vadd.f32 %v649, %v650
    %v652 = vrot.slane %v651, 2
    %v653 = vadd.f32 %v651, %v652
    %v654 = vrot.slane %v653, 1
    %v655 = vadd.f32 %v653, %v654
    %s656 = vtos %v655
    %s657 = sadd.f32 %s656, 0.0
    %s658 = scalar_lea.vmem [#allocation6], 16
    %v659 = vld [vmem:[%s658] sm:$0xff]
    %v660 = vld [vmem:[%s658 + $0x8] sm:$0xff]
    %661 = vst.msk [vmem:[#allocation2 + $0x20] sm:$0xff] %vm58, %v659
    %662 = vst.msk [vmem:[#allocation2 + $0x38] sm:$0xff] %vm58, %v660
    %v663 = vld [vmem:[#allocation2] sm:$0x80]
    %v664 = vld [vmem:[#allocation2 + $0x8] sm:$0x80]
    %v665 = vld [vmem:[#allocation2 + $0x18] sm:$0xff]
    %v666 = vld [vmem:[#allocation2 + $0x20] sm:$0xff]
    %v667 = vld [vmem:[#allocation2 + $0x30] sm:$0x7f]
    %v668 = vld [vmem:[#allocation2 + $0x38] sm:$0x7f]
    %v669 = vld [vmem:[#allocation2 + $0x30] sm:$0xff]
    %v670 = vld [vmem:[#allocation2 + $0x38] sm:$0xff]
    %v671 = vld [vmem:[#allocation2 + $0x18] sm:$0xfe]
    %v672 = vld [vmem:[#allocation2 + $0x20] sm:$0xfe]
    %v673 = vld [vmem:[#allocation2 + $0x48] sm:$0x1]
    %v674 = vld [vmem:[#allocation2 + $0x50] sm:$0x1]
    %v681 = vrot.slane %v671, 2
    %v682 = vrot.slane %v672, 2
    %v683 = vrot.slane %v669, 2
    %v684 = vsel %vm97, %v681, %v683
    %v685 = vrot.slane %v670, 2
    %v686 = vsel %vm97, %v682, %v685
    %v687 = vrot.slane %v673, 2
    %v688 = vsel %vm97, %v683, %v687
    %v689 = vrot.slane %v674, 2
    %v690 = vsel %vm97, %v685, %v689
    %691 = vrot.lane.b32.xlu0 %v681, 2
    %v692 = vpop.permute.xlu0 %691
    %693 = vrot.lane.b32.xlu0 %v682, 2
    %v694 = vpop.permute.xlu0 %693
    %695 = vrot.lane.b32.xlu0 %v684, 2
    %v696 = vpop.permute.xlu0 %695
    %697 = vrot.lane.b32.xlu0 %v686, 2
    %v698 = vpop.permute.xlu0 %697
    %699 = vrot.lane.b32.xlu0 %v688, 2
    %v700 = vpop.permute.xlu0 %699
    %701 = vrot.lane.b32.xlu0 %v690, 2
    %v702 = vpop.permute.xlu0 %701
    %v703 = vsel %vm120, %v692, %v694
    %v704 = vsel %vm120, %v696, %v698
    %v705 = vsel %vm120, %v700, %v702
    %v709 = vsub.f32 %v664, %v703
    %v710 = vsub.f32 %v666, %v704
    %v711 = vsub.f32 %v668, %v705
    %712 = vrot.lane.b32.xlu0 %v682, 126
    %v713 = vpop.permute.xlu0 %712
    %714 = vrot.lane.b32.xlu0 %v686, 126
    %v715 = vpop.permute.xlu0 %714
    %716 = vrot.lane.b32.xlu0 %v690, 126
    %v717 = vpop.permute.xlu0 %716
    %v721 = vsub.f32 %v663, %v713
    %v722 = vsub.f32 %v664, %v713
    %v723 = vsub.f32 %v665, %v715
    %v724 = vsub.f32 %v666, %v715
    %v725 = vsub.f32 %v667, %v717
    %v726 = vsub.f32 %v668, %v717
    %729 = vrot.lane.b32.xlu0 %v665, 2
    %v730 = vpop.permute.xlu0 %729
    %731 = vrot.lane.b32.xlu0 %v666, 2
    %v732 = vpop.permute.xlu0 %731
    %733 = vrot.lane.b32.xlu0 %v669, 2
    %v734 = vpop.permute.xlu0 %733
    %735 = vrot.lane.b32.xlu0 %v670, 2
    %v736 = vpop.permute.xlu0 %735
    %v737 = vsel %vm120, %v730, %v732
    %v738 = vsel %vm120, %v734, %v736
    %v741 = vsub.f32 %v666, %v737
    %v742 = vsub.f32 %v670, %v738
    %v746 = vsub.f32 %v664, %v682
    %v747 = vsub.f32 %v666, %v686
    %v748 = vsub.f32 %v668, %v690
    %755 = vrot.lane.b32.xlu0 %v721, 2
    %v756 = vpop.permute.xlu0 %755
    %757 = vrot.lane.b32.xlu0 %v722, 2
    %v758 = vpop.permute.xlu0 %757
    %759 = vrot.lane.b32.xlu0 %v723, 2
    %v760 = vpop.permute.xlu0 %759
    %761 = vrot.lane.b32.xlu0 %v724, 2
    %v762 = vpop.permute.xlu0 %761
    %763 = vrot.lane.b32.xlu0 %v725, 2
    %v764 = vpop.permute.xlu0 %763
    %765 = vrot.lane.b32.xlu0 %v726, 2
    %v766 = vpop.permute.xlu0 %765
    %v767 = vsel %vm120, %v756, %v758
    %v768 = vsel %vm120, %v760, %v762
    %v769 = vsel %vm120, %v764, %v766
    %v773 = vsub.f32 %v709, %v767
    %v774 = vsub.f32 %v710, %v768
    %v775 = vsub.f32 %v711, %v769
    %v776 = vmul.f32 %v741, 2.0
    %v777 = vmul.f32 %v742, 2.0
    %v780 = vrot.slane %v776, 1
    %v781 = vrot.slane %v777, 1
    %v782 = vsel %vm198, %v780, %v781
    %v786 = vadd.f32 %v773, %v780
    %v787 = vadd.f32 %v774, %v782
    %v788 = vadd.f32 %v775, %v781
    %v789 = vadd.f32 %v709, %v767
    %v790 = vadd.f32 %v710, %v768
    %v791 = vadd.f32 %v711, %v769
    %v792 = vmul.f32 %v746, 2.0
    %v793 = vmul.f32 %v747, 2.0
    %v794 = vmul.f32 %v748, 2.0
    %798 = vrot.lane.b32.xlu0 %v792, 1
    %v799 = vpop.permute.xlu0 %798
    %800 = vrot.lane.b32.xlu0 %v793, 1
    %v801 = vpop.permute.xlu0 %800
    %802 = vrot.lane.b32.xlu0 %v794, 1
    %v803 = vpop.permute.xlu0 %802
    %v807 = vadd.f32 %v789, %v799
    %v808 = vadd.f32 %v790, %v801
    %v809 = vadd.f32 %v791, %v803
    %v810 = vmul.f32 %v786, %v786
    %v811 = vmul.f32 %v787, %v787
    %v812 = vmul.f32 %v788, %v788
    %v813 = vmul.f32 %v807, %v807
    %v814 = vmul.f32 %v808, %v808
    %v815 = vmul.f32 %v809, %v809
    %v816 = vadd.f32 %v810, %v813
    %v817 = vadd.f32 %v811, %v814
    %v818 = vadd.f32 %v812, %v815
    %v819 = vadd.f32 %v816, 1e-10
    %v820 = vadd.f32 %v817, 1e-10
    %v821 = vadd.f32 %v818, 1e-10
    %vm822 = vcmp.gt.f32.partialorder %v819, 4.0
    %vm823 = vcmp.gt.f32.partialorder %v820, 4.0
    %vm824 = vcmp.gt.f32.partialorder %v821, 4.0
    %v825 = vsel %vm822, 0.0, %v819
    %v826 = vsel %vm823, 0.0, %v820
    %v827 = vsel %vm824, 0.0, %v821
    %s828 = scalar_lea.vmem [#allocation8], 16
    %v829 = vld [vmem:[%s828] sm:$0xff]
    %v830 = vld [vmem:[%s828 + $0x8] sm:$0xff]
    %831 = vst.msk [vmem:[#allocation2 + $0x20] sm:$0xff] %vm58, %v829
    %832 = vst.msk [vmem:[#allocation2 + $0x38] sm:$0xff] %vm58, %v830
    %v833 = vld [vmem:[#allocation2] sm:$0x80]
    %v834 = vld [vmem:[#allocation2 + $0x8] sm:$0x80]
    %v835 = vld [vmem:[#allocation2 + $0x18] sm:$0xff]
    %v836 = vld [vmem:[#allocation2 + $0x20] sm:$0xff]
    %v837 = vld [vmem:[#allocation2 + $0x30] sm:$0x7f]
    %v838 = vld [vmem:[#allocation2 + $0x38] sm:$0x7f]
    %v839 = vld [vmem:[#allocation2 + $0x30] sm:$0xff]
    %v840 = vld [vmem:[#allocation2 + $0x38] sm:$0xff]
    %v841 = vld [vmem:[#allocation2 + $0x18] sm:$0xfe]
    %v842 = vld [vmem:[#allocation2 + $0x20] sm:$0xfe]
    %v843 = vld [vmem:[#allocation2 + $0x48] sm:$0x1]
    %v844 = vld [vmem:[#allocation2 + $0x50] sm:$0x1]
    %v851 = vrot.slane %v841, 2
    %v852 = vrot.slane %v842, 2
    %v853 = vrot.slane %v839, 2
    %v854 = vsel %vm97, %v851, %v853
    %v855 = vrot.slane %v840, 2
    %v856 = vsel %vm97, %v852, %v855
    %v857 = vrot.slane %v843, 2
    %v858 = vsel %vm97, %v853, %v857
    %v859 = vrot.slane %v844, 2
    %v860 = vsel %vm97, %v855, %v859
    %861 = vrot.lane.b32.xlu0 %v851, 2
    %v862 = vpop.permute.xlu0 %861
    %863 = vrot.lane.b32.xlu0 %v852, 2
    %v864 = vpop.permute.xlu0 %863
    %865 = vrot.lane.b32.xlu0 %v854, 2
    %v866 = vpop.permute.xlu0 %865
    %867 = vrot.lane.b32.xlu0 %v856, 2
    %v868 = vpop.permute.xlu0 %867
    %869 = vrot.lane.b32.xlu0 %v858, 2
    %v870 = vpop.permute.xlu0 %869
    %871 = vrot.lane.b32.xlu0 %v860, 2
    %v872 = vpop.permute.xlu0 %871
    %v873 = vsel %vm120, %v862, %v864
    %v874 = vsel %vm120, %v866, %v868
    %v875 = vsel %vm120, %v870, %v872
    %v879 = vsub.f32 %v834, %v873
    %v880 = vsub.f32 %v836, %v874
    %v881 = vsub.f32 %v838, %v875
    %882 = vrot.lane.b32.xlu0 %v852, 126
    %v883 = vpop.permute.xlu0 %882
    %884 = vrot.lane.b32.xlu0 %v856, 126
    %v885 = vpop.permute.xlu0 %884
    %886 = vrot.lane.b32.xlu0 %v860, 126
    %v887 = vpop.permute.xlu0 %886
    %v891 = vsub.f32 %v833, %v883
    %v892 = vsub.f32 %v834, %v883
    %v893 = vsub.f32 %v835, %v885
    %v894 = vsub.f32 %v836, %v885
    %v895 = vsub.f32 %v837, %v887
    %v896 = vsub.f32 %v838, %v887
    %899 = vrot.lane.b32.xlu0 %v835, 2
    %v900 = vpop.permute.xlu0 %899
    %901 = vrot.lane.b32.xlu0 %v836, 2
    %v902 = vpop.permute.xlu0 %901
    %903 = vrot.lane.b32.xlu0 %v839, 2
    %v904 = vpop.permute.xlu0 %903
    %905 = vrot.lane.b32.xlu0 %v840, 2
    %v906 = vpop.permute.xlu0 %905
    %v907 = vsel %vm120, %v900, %v902
    %v908 = vsel %vm120, %v904, %v906
    %v911 = vsub.f32 %v836, %v907
    %v912 = vsub.f32 %v840, %v908
    %v916 = vsub.f32 %v834, %v852
    %v917 = vsub.f32 %v836, %v856
    %v918 = vsub.f32 %v838, %v860
    %925 = vrot.lane.b32.xlu0 %v891, 2
    %v926 = vpop.permute.xlu0 %925
    %927 = vrot.lane.b32.xlu0 %v892, 2
    %v928 = vpop.permute.xlu0 %927
    %929 = vrot.lane.b32.xlu0 %v893, 2
    %v930 = vpop.permute.xlu0 %929
    %931 = vrot.lane.b32.xlu0 %v894, 2
    %v932 = vpop.permute.xlu0 %931
    %933 = vrot.lane.b32.xlu0 %v895, 2
    %v934 = vpop.permute.xlu0 %933
    %935 = vrot.lane.b32.xlu0 %v896, 2
    %v936 = vpop.permute.xlu0 %935
    %v937 = vsel %vm120, %v926, %v928
    %v938 = vsel %vm120, %v930, %v932
    %v939 = vsel %vm120, %v934, %v936
    %v943 = vsub.f32 %v879, %v937
    %v944 = vsub.f32 %v880, %v938
    %v945 = vsub.f32 %v881, %v939
    %v946 = vmul.f32 %v911, 2.0
    %v947 = vmul.f32 %v912, 2.0
    %v950 = vrot.slane %v946, 1
    %v951 = vrot.slane %v947, 1
    %v952 = vsel %vm198, %v950, %v951
    %v956 = vadd.f32 %v943, %v950
    %v957 = vadd.f32 %v944, %v952
    %v958 = vadd.f32 %v945, %v951
    %v959 = vadd.f32 %v879, %v937
    %v960 = vadd.f32 %v880, %v938
    %v961 = vadd.f32 %v881, %v939
    %v962 = vmul.f32 %v916, 2.0
    %v963 = vmul.f32 %v917, 2.0
    %v964 = vmul.f32 %v918, 2.0
    %968 = vrot.lane.b32.xlu0 %v962, 1
    %v969 = vpop.permute.xlu0 %968
    %970 = vrot.lane.b32.xlu0 %v963, 1
    %v971 = vpop.permute.xlu0 %970
    %972 = vrot.lane.b32.xlu0 %v964, 1
    %v973 = vpop.permute.xlu0 %972
    %v977 = vadd.f32 %v959, %v969
    %v978 = vadd.f32 %v960, %v971
    %v979 = vadd.f32 %v961, %v973
    %v980 = vmul.f32 %v956, %v956
    %v981 = vmul.f32 %v957, %v957
    %v982 = vmul.f32 %v958, %v958
    %v983 = vmul.f32 %v977, %v977
    %v984 = vmul.f32 %v978, %v978
    %v985 = vmul.f32 %v979, %v979
    %v986 = vadd.f32 %v980, %v983
    %v987 = vadd.f32 %v981, %v984
    %v988 = vadd.f32 %v982, %v985
    %v989 = vadd.f32 %v986, 1e-10
    %v990 = vadd.f32 %v987, 1e-10
    %v991 = vadd.f32 %v988, 1e-10
    %vm992 = vcmp.gt.f32.partialorder %v989, 4.0
    %vm993 = vcmp.gt.f32.partialorder %v990, 4.0
    %vm994 = vcmp.gt.f32.partialorder %v991, 4.0
    %v995 = vsel %vm992, 0.0, %v989
    %v996 = vsel %vm993, 0.0, %v990
    %v997 = vsel %vm994, 0.0, %v991
    %v998 = vmax.f32 %v825, %v995
    %v999 = vmax.f32 %v826, %v996
    %v1000 = vmax.f32 %v827, %v997
    %v1001 = vadd.f32 %v998, 1e-20
    %v1002 = vadd.f32 %v999, 1e-20
    %v1003 = vadd.f32 %v1000, 1e-20
    %v1004 = vlog2.pop %v1001
    %v1005 = vmul.f32 %v1004, 0.6931472
    %v1006 = vlog2.pop %v1002
    %v1007 = vmul.f32 %v1006, 0.6931472
    %v1008 = vlog2.pop %v1003
    %v1009 = vmul.f32 %v1008, 0.6931472
    %v1010 = vmul.f32 %v1005, 0.4
    %v1011 = vmul.f32 %v1007, 0.4
    %v1012 = vmul.f32 %v1009, 0.4
    %v1013 = vmul.f32 %v1010, 1.442695
    %v1014 = vpow.pop %v1013
    %v1015 = vmul.f32 %v1011, 1.442695
    %v1016 = vpow.pop %v1015
    %v1017 = vmul.f32 %v1012, 1.442695
    %v1018 = vpow.pop %v1017
    %s1019 = scalar_lea.vmem [#allocation3], 16
    %v1020 = vld [vmem:[%s1019] sm:$0xff]
    %v1021 = vld [vmem:[%s1019 + $0x8] sm:$0xff]
    %1022 = vst.msk [vmem:[#allocation2 + $0x20] sm:$0xff] %vm58, %v1020
    %1023 = vst.msk [vmem:[#allocation2 + $0x38] sm:$0xff] %vm58, %v1021
    %v1024 = vld [vmem:[#allocation2] sm:$0x80]
    %v1025 = vld [vmem:[#allocation2 + $0x8] sm:$0x80]
    %v1026 = vld [vmem:[#allocation2 + $0x18] sm:$0xff]
    %v1027 = vld [vmem:[#allocation2 + $0x20] sm:$0xff]
    %v1028 = vld [vmem:[#allocation2 + $0x30] sm:$0x7f]
    %v1029 = vld [vmem:[#allocation2 + $0x38] sm:$0x7f]
    %v1030 = vld [vmem:[#allocation2 + $0x30] sm:$0xff]
    %v1031 = vld [vmem:[#allocation2 + $0x38] sm:$0xff]
    %v1032 = vld [vmem:[#allocation2 + $0x18] sm:$0xfe]
    %v1033 = vld [vmem:[#allocation2 + $0x20] sm:$0xfe]
    %v1034 = vld [vmem:[#allocation2 + $0x48] sm:$0x1]
    %v1035 = vld [vmem:[#allocation2 + $0x50] sm:$0x1]
    %v1042 = vrot.slane %v1032, 2
    %v1043 = vrot.slane %v1033, 2
    %v1044 = vrot.slane %v1030, 2
    %v1045 = vsel %vm97, %v1042, %v1044
    %v1046 = vrot.slane %v1031, 2
    %v1047 = vsel %vm97, %v1043, %v1046
    %v1048 = vrot.slane %v1034, 2
    %v1049 = vsel %vm97, %v1044, %v1048
    %v1050 = vrot.slane %v1035, 2
    %v1051 = vsel %vm97, %v1046, %v1050
    %1052 = vrot.lane.b32.xlu0 %v1042, 2
    %v1053 = vpop.permute.xlu0 %1052
    %1054 = vrot.lane.b32.xlu0 %v1043, 2
    %v1055 = vpop.permute.xlu0 %1054
    %1056 = vrot.lane.b32.xlu0 %v1045, 2
    %v1057 = vpop.permute.xlu0 %1056
    %1058 = vrot.lane.b32.xlu0 %v1047, 2
    %v1059 = vpop.permute.xlu0 %1058
    %1060 = vrot.lane.b32.xlu0 %v1049, 2
    %v1061 = vpop.permute.xlu0 %1060
    %1062 = vrot.lane.b32.xlu0 %v1051, 2
    %v1063 = vpop.permute.xlu0 %1062
    %v1064 = vsel %vm120, %v1053, %v1055
    %v1065 = vsel %vm120, %v1057, %v1059
    %v1066 = vsel %vm120, %v1061, %v1063
    %v1070 = vsub.f32 %v1025, %v1064
    %v1071 = vsub.f32 %v1027, %v1065
    %v1072 = vsub.f32 %v1029, %v1066
    %1073 = vrot.lane.b32.xlu0 %v1043, 126
    %v1074 = vpop.permute.xlu0 %1073
    %1075 = vrot.lane.b32.xlu0 %v1047, 126
    %v1076 = vpop.permute.xlu0 %1075
    %1077 = vrot.lane.b32.xlu0 %v1051, 126
    %v1078 = vpop.permute.xlu0 %1077
    %v1082 = vsub.f32 %v1024, %v1074
    %v1083 = vsub.f32 %v1025, %v1074
    %v1084 = vsub.f32 %v1026, %v1076
    %v1085 = vsub.f32 %v1027, %v1076
    %v1086 = vsub.f32 %v1028, %v1078
    %v1087 = vsub.f32 %v1029, %v1078
    %1090 = vrot.lane.b32.xlu0 %v1026, 2
    %v1091 = vpop.permute.xlu0 %1090
    %1092 = vrot.lane.b32.xlu0 %v1027, 2
    %v1093 = vpop.permute.xlu0 %1092
    %1094 = vrot.lane.b32.xlu0 %v1030, 2
    %v1095 = vpop.permute.xlu0 %1094
    %1096 = vrot.lane.b32.xlu0 %v1031, 2
    %v1097 = vpop.permute.xlu0 %1096
    %v1098 = vsel %vm120, %v1091, %v1093
    %v1099 = vsel %vm120, %v1095, %v1097
    %v1102 = vsub.f32 %v1027, %v1098
    %v1103 = vsub.f32 %v1031, %v1099
    %v1107 = vsub.f32 %v1025, %v1043
    %v1108 = vsub.f32 %v1027, %v1047
    %v1109 = vsub.f32 %v1029, %v1051
    %1116 = vrot.lane.b32.xlu0 %v1082, 2
    %v1117 = vpop.permute.xlu0 %1116
    %1118 = vrot.lane.b32.xlu0 %v1083, 2
    %v1119 = vpop.permute.xlu0 %1118
    %1120 = vrot.lane.b32.xlu0 %v1084, 2
    %v1121 = vpop.permute.xlu0 %1120
    %1122 = vrot.lane.b32.xlu0 %v1085, 2
    %v1123 = vpop.permute.xlu0 %1122
    %1124 = vrot.lane.b32.xlu0 %v1086, 2
    %v1125 = vpop.permute.xlu0 %1124
    %1126 = vrot.lane.b32.xlu0 %v1087, 2
    %v1127 = vpop.permute.xlu0 %1126
    %v1128 = vsel %vm120, %v1117, %v1119
    %v1129 = vsel %vm120, %v1121, %v1123
    %v1130 = vsel %vm120, %v1125, %v1127
    %v1134 = vsub.f32 %v1070, %v1128
    %v1135 = vsub.f32 %v1071, %v1129
    %v1136 = vsub.f32 %v1072, %v1130
    %v1137 = vmul.f32 %v1102, 2.0
    %v1138 = vmul.f32 %v1103, 2.0
    %v1141 = vrot.slane %v1137, 1
    %v1142 = vrot.slane %v1138, 1
    %v1143 = vsel %vm198, %v1141, %v1142
    %v1147 = vadd.f32 %v1134, %v1141
    %v1148 = vadd.f32 %v1135, %v1143
    %v1149 = vadd.f32 %v1136, %v1142
    %v1150 = vadd.f32 %v1070, %v1128
    %v1151 = vadd.f32 %v1071, %v1129
    %v1152 = vadd.f32 %v1072, %v1130
    %v1153 = vmul.f32 %v1107, 2.0
    %v1154 = vmul.f32 %v1108, 2.0
    %v1155 = vmul.f32 %v1109, 2.0
    %1159 = vrot.lane.b32.xlu0 %v1153, 1
    %v1160 = vpop.permute.xlu0 %1159
    %1161 = vrot.lane.b32.xlu0 %v1154, 1
    %v1162 = vpop.permute.xlu0 %1161
    %1163 = vrot.lane.b32.xlu0 %v1155, 1
    %v1164 = vpop.permute.xlu0 %1163
    %v1168 = vadd.f32 %v1150, %v1160
    %v1169 = vadd.f32 %v1151, %v1162
    %v1170 = vadd.f32 %v1152, %v1164
    %v1171 = vmul.f32 %v1147, %v1147
    %v1172 = vmul.f32 %v1148, %v1148
    %v1173 = vmul.f32 %v1149, %v1149
    %v1174 = vmul.f32 %v1168, %v1168
    %v1175 = vmul.f32 %v1169, %v1169
    %v1176 = vmul.f32 %v1170, %v1170
    %v1177 = vadd.f32 %v1171, %v1174
    %v1178 = vadd.f32 %v1172, %v1175
    %v1179 = vadd.f32 %v1173, %v1176
    %v1180 = vadd.f32 %v1177, 1e-10
    %v1181 = vadd.f32 %v1178, 1e-10
    %v1182 = vadd.f32 %v1179, 1e-10
    %vm1183 = vcmp.gt.f32.partialorder %v1180, 4.0
    %vm1184 = vcmp.gt.f32.partialorder %v1181, 4.0
    %vm1185 = vcmp.gt.f32.partialorder %v1182, 4.0
    %v1186 = vsel %vm1183, 0.0, %v1180
    %v1187 = vsel %vm1184, 0.0, %v1181
    %v1188 = vsel %vm1185, 0.0, %v1182
    %v1189 = vadd.f32 %v1186, 1e-20
    %v1190 = vadd.f32 %v1187, 1e-20
    %v1191 = vadd.f32 %v1188, 1e-20
    %v1192 = vlog2.pop %v1189
    %v1193 = vmul.f32 %v1192, 0.6931472
    %v1194 = vlog2.pop %v1190
    %v1195 = vmul.f32 %v1194, 0.6931472
    %v1196 = vlog2.pop %v1191
    %v1197 = vmul.f32 %v1196, 0.6931472
    %v1198 = vmul.f32 %v1193, 0.4
    %v1199 = vmul.f32 %v1195, 0.4
    %v1200 = vmul.f32 %v1197, 0.4
    %v1201 = vmul.f32 %v1198, 1.442695
    %v1202 = vpow.pop %v1201
    %v1203 = vmul.f32 %v1199, 1.442695
    %v1204 = vpow.pop %v1203
    %v1205 = vmul.f32 %v1200, 1.442695
    %v1206 = vpow.pop %v1205
    %v1207 = vsub.f32 %v1202, %v1014
    %v1208 = vsub.f32 %v1204, %v1016
    %v1209 = vsub.f32 %v1206, %v1018
    %v1210 = vand.u32 2147483647, %v1207
    %v1211 = vand.u32 2147483647, %v1208
    %v1212 = vand.u32 2147483647, %v1209
    %v1216 = vrot.slane %v1210, 7
    %v1217 = vrot.slane %v1211, 7
    %v1218 = vsel %vm633, %v1216, %v1217
    %v1219 = vrot.slane %v1212, 7
    %v1220 = vsel %vm633, %v1217, %v1219
    %1221 = vrot.lane.b32.xlu0 %v1218, 127
    %v1222 = vpop.permute.xlu0 %1221
    %1223 = vrot.lane.b32.xlu0 %v1220, 127
    %v1224 = vpop.permute.xlu0 %1223
    %v1227 = vsel %vm58, %v1222, 0.0
    %v1228 = vsel %vm58, %v1224, 0.0
    %v1229 = vadd.f32 %v1227, %v1228
    %1230 = vadd.xlane.f32.xlu0 %v1229
    %v1231 = vpop.xlane.xlu0 %1230
    %v1232 = vrot.slane %v1231, 4
    %v1233 = vadd.f32 %v1231, %v1232
    %v1234 = vrot.slane %v1233, 2
    %v1235 = vadd.f32 %v1233, %v1234
    %v1236 = vrot.slane %v1235, 1
    %v1237 = vadd.f32 %v1235, %v1236
    %s1238 = vtos %v1237
    %s1239 = sadd.f32 %s657, %s1238
    %v1240 = vstv %s1239
    %1241 = vst [vmem:[#allocation9] sm:$0xff] %v1240
    // Predicated region
    $region26: #{tpu_custom_call.1} parent=1 // pred_check
      _
    $region27: #{tpu_custom_call.1} parent=1 // pred_check_branch
      %1243 = sbr.rel (0) target = $region29
    $region28: #{tpu_custom_call.1} parent=1 // pred_region
      %s1245 = ssub.s32 128, 128
      %1246 = vsyncadd [#allocation5], %s1245
      %s1248 = sshll.u32 [#allocation9], 4
      %s1249 = int_to_ptr.vmem [resolvable:$true] %s1248
      %1251 = dma.vmem_to_hbm [thread:$0]  %s1249, 128, %s3, [#allocation5]
    $region29: #{tpu_custom_call.1} parent=1 // pred_fallthru
      _
    // Predicated region
    $region30: #{tpu_custom_call.1} parent=1 // pred_check
      _
    $region31: #{tpu_custom_call.1} parent=1 // pred_check_branch
      %1253 = sbr.rel (0) target = $region33
    $region32: #{tpu_custom_call.1} parent=1 // pred_region
      %1254 = dma.done [#allocation5], 128
    $region33: #{tpu_custom_call.1} parent=1 // pred_fallthru
      _
    %1255 = vsyncpa [#allocation4], 1
    %1256 = vsyncpa [#allocation7], 1
    %1257 = vsyncpa [#allocation5], 1

</llo_original>
